<compile_context>
chip_gen: v5e
topology: v5e:2x2
jax: 0.10.0
libtpu: 0.0.40
codegen_flags: <defaults>
</compile_context>

<pallas_src>
import functools
import math

import jax
import jax.numpy as jnp
from jax.experimental import pallas as pl
from jax.experimental.pallas import tpu as pltpu

N_LAYERS = 2


def _layer_norm(z, w, b, eps=1e-5):
    mu = jnp.mean(z, axis=-1, keepdims=True)
    var = jnp.mean((z - mu) ** 2, axis=-1, keepdims=True)
    return (z - mu) * jax.lax.rsqrt(var + eps) * w + b


# --------------------------------- kernel ----------------------------------
def transformer_kernel(x0_ref, w_lin_ref, b_lin_ref,
                       w_in_ref, b_in_ref, w_oph_ref, b_op_ref,
                       w1_ref, b1_ref, w2_ref, b2_ref,
                       ln1w_ref, ln1b_ref, ln2w_ref, ln2b_ref,
                       w_out_ref, b_out_ref,
                       o_ref, z_ref, *, n_heads):
    bf16 = jnp.bfloat16

    # Layer 0: initialise the activation carry with the input Linear.
    @pl.when(pl.program_id(0) == 0)
    def _init():
        z_ref[...] = (jnp.dot(x0_ref[...].astype(bf16), w_lin_ref[...],
                              preferred_element_type=jnp.float32)
                      + b_lin_ref[...])

    z = z_ref[...]                       # (B, D) f32 activation carry
    B, D = z.shape
    H = n_heads
    hd = D // H
    scale = 1.0 / math.sqrt(hd)

    # ---------------- self-attention (post-LN encoder layer) ----------------
    zb = z.astype(bf16)
    qkv = (jnp.dot(zb, w_in_ref[...], preferred_element_type=jnp.float32)
           + b_in_ref[...])                                   # (B, 3D) f32
    # Split heads into a leading batch dim (static lane slices + stack).
    q3 = jnp.stack([qkv[:, 0 * D + h * hd: 0 * D + (h + 1) * hd]
                    for h in range(H)], axis=0)               # (H, B, hd)
    k3 = jnp.stack([qkv[:, 1 * D + h * hd: 1 * D + (h + 1) * hd]
                    for h in range(H)], axis=0)
    v3 = jnp.stack([qkv[:, 2 * D + h * hd: 2 * D + (h + 1) * hd]
                    for h in range(H)], axis=0)
    q3 = (q3 * scale).astype(bf16)
    k3 = k3.astype(bf16)
    v3 = v3.astype(bf16)

    # Two head-batched contractions (MXU), softmax in f32.
    s = jnp.einsum("hqe,hke->hqk", q3, k3,
                   preferred_element_type=jnp.float32)        # (H, B, B)
    s = s - jnp.max(s, axis=-1, keepdims=True)
    es = jnp.exp(s)
    p = es * pl.reciprocal(jnp.sum(es, axis=-1, keepdims=True), approx=True)
    ctx = jnp.einsum("hqk,hke->hqe", p.astype(bf16), v3,
                     preferred_element_type=jnp.float32)      # (H, B, hd)

    # Output projection folded per head, then summed over heads.
    sa_h = jnp.einsum("hqe,hed->hqd", ctx.astype(bf16), w_oph_ref[...],
                      preferred_element_type=jnp.float32)     # (H, B, D)
    sa = jnp.sum(sa_h, axis=0) + b_op_ref[...]                # (B, D)

    z1 = _layer_norm(z + sa, ln1w_ref[...], ln1b_ref[...])

    # ------------------------------- FFN ------------------------------------
    ff = jnp.maximum(jnp.dot(z1.astype(bf16), w1_ref[...],
                             preferred_element_type=jnp.float32)
                     + b1_ref[...], 0.0)
    ff = (jnp.dot(ff.astype(bf16), w2_ref[...],
                  preferred_element_type=jnp.float32) + b2_ref[...])
    z2 = _layer_norm(z1 + ff, ln2w_ref[...], ln2b_ref[...])
    z_ref[...] = z2

    # Output head (lane-dense 128-wide store).  Only computed on the final
    # layer; the constant output block index keeps o_ref resident in VMEM and
    # its single HBM writeback happens after the last grid step.
    @pl.when(pl.program_id(0) == pl.num_programs(0) - 1)
    def _head():
        o_ref[...] = (jnp.dot(z2.astype(bf16), w_out_ref[...],
                              preferred_element_type=jnp.float32)
                      + b_out_ref[...])


# -------------------------------- wrapper -----------------------------------
def transformer_forward(x, t, params, n_heads):
    del t  # dead under batch_first=False semantics: never reaches z[:, 0, :]
    B, S1, d_in = x.shape
    D = params["w_lin"].shape[0]
    n_layers = params["w_in"].shape[0]
    H = n_heads
    hd = D // H
    d_out = params["w_out"].shape[0]
    d_out_pad = max(128, ((d_out + 127) // 128) * 128)
    bf16 = jnp.bfloat16
    f32 = jnp.float32

    # Only batch-column 0 of the concat can influence the output.
    x0 = x[:, 0, :]                                           # (B, d_in)

    # Wrapper-side layout plumbing: pre-transpose weights (contracted-major),
    # reshape the attention out-proj per head, cast matmul operands to bf16,
    # pad the output head to 128 lanes.
    w_lin = params["w_lin"].T.astype(bf16)                    # (d_in, D)
    b_lin = params["b_lin"].astype(f32)                       # (1, D)
    w_in = jnp.transpose(params["w_in"], (0, 2, 1)).astype(bf16)   # (L, D, 3D)
    b_in = params["b_in"].astype(f32)                               # (L, 1, 3D)
    w_oph = jnp.transpose(params["w_op"], (0, 2, 1)) \
               .reshape(n_layers, H, hd, D).astype(bf16)            # (L, H, hd, D)
    b_op = params["b_op"].astype(f32)                               # (L, 1, D)
    w1 = jnp.transpose(params["w1"], (0, 2, 1)).astype(bf16)        # (L, D, D)
    b1 = params["b1"].astype(f32)
    w2 = jnp.transpose(params["w2"], (0, 2, 1)).astype(bf16)        # (L, D, D)
    b2 = params["b2"].astype(f32)
    ln1w = params["ln1w"].astype(f32)
    ln1b = params["ln1b"].astype(f32)
    ln2w = params["ln2w"].astype(f32)
    ln2b = params["ln2b"].astype(f32)
    w_out = jnp.zeros((D, d_out_pad), f32).at[:, :d_out].set(
        params["w_out"].T).astype(bf16)                       # (D, 128)
    b_out = jnp.zeros((1, d_out_pad), f32).at[:, :d_out].set(
        params["b_out"])                                      # (1, 128)

    lmap2 = lambda l: (0, 0)
    lmap3 = lambda l: (l, 0, 0)
    lmap4 = lambda l: (l, 0, 0, 0)

    in_specs = [
        pl.BlockSpec((B, d_in), lmap2),            # x0
        pl.BlockSpec((d_in, D), lmap2),            # w_lin
        pl.BlockSpec((1, D), lmap2),               # b_lin
        pl.BlockSpec((None, D, 3 * D), lmap3),     # w_in   (streamed per layer)
        pl.BlockSpec((None, 1, 3 * D), lmap3),     # b_in
        pl.BlockSpec((None, H, hd, D), lmap4),     # w_oph
        pl.BlockSpec((None, 1, D), lmap3),         # b_op
        pl.BlockSpec((None, D, D), lmap3),         # w1
        pl.BlockSpec((None, 1, D), lmap3),         # b1
        pl.BlockSpec((None, D, D), lmap3),         # w2
        pl.BlockSpec((None, 1, D), lmap3),         # b2
        pl.BlockSpec((None, 1, D), lmap3),         # ln1w
        pl.BlockSpec((None, 1, D), lmap3),         # ln1b
        pl.BlockSpec((None, 1, D), lmap3),         # ln2w
        pl.BlockSpec((None, 1, D), lmap3),         # ln2b
        pl.BlockSpec((D, d_out_pad), lmap2),       # w_out (padded, lane-dense)
        pl.BlockSpec((1, d_out_pad), lmap2),       # b_out
    ]

    kernel = functools.partial(transformer_kernel, n_heads=H)
    out = pl.pallas_call(
        kernel,
        grid=(n_layers,),
        in_specs=in_specs,
        out_specs=pl.BlockSpec((B, d_out_pad), lmap2),
        out_shape=jax.ShapeDtypeStruct((B, d_out_pad), jnp.float32),
        scratch_shapes=[pltpu.VMEM((B, D), jnp.float32)],     # activation carry
        compiler_params=pltpu.CompilerParams(
            dimension_semantics=("arbitrary",),               # sequential layer carry
            vmem_limit_bytes=32 * 1024 * 1024),
    )(x0, w_lin, b_lin, w_in, b_in, w_oph, b_op, w1, b1, w2, b2,
      ln1w, ln1b, ln2w, ln2b, w_out, b_out)
    return out[:, :d_out]


# ---------------- pure-JAX reference (mirrors full PyTorch semantics) ----------------
def _ref_mha(z, w_in, b_in, w_op, b_op, n_heads):
    L, N, E = z.shape
    hd = E // n_heads
    qkv = z @ w_in.T + b_in
    q, k, v = jnp.split(qkv, 3, axis=-1)

    def split_heads(a):
        return a.reshape(L, N, n_heads, hd).transpose(1, 2, 0, 3)  # (N,H,L,hd)

    q, k, v = map(split_heads, (q, k, v))
    s = jnp.einsum("nhld,nhmd->nhlm", q, k) / math.sqrt(hd)
    p = jax.nn.softmax(s, axis=-1)
    o = jnp.einsum("nhlm,nhmd->nhld", p, v)
    o = o.transpose(2, 0, 1, 3).reshape(L, N, E)
    return o @ w_op.T + b_op


def reference_forward(x, t, params, n_heads):
    h = x @ params["w_lin"].T + params["b_lin"]
    z = jnp.concatenate([h, t], axis=1)           # (B, S, D) == (L, N, E)
    for l in range(params["w_in"].shape[0]):
        sa = _ref_mha(z, params["w_in"][l], params["b_in"][l],
                      params["w_op"][l], params["b_op"][l], n_heads)
        z = _layer_norm(z + sa, params["ln1w"][l], params["ln1b"][l])
        ff = jax.nn.relu(z @ params["w1"][l] .T + params["b1"][l])
        ff = ff @ params["w2"][l].T + params["b2"][l]
        z = _layer_norm(z + ff, params["ln2w"][l], params["ln2b"][l])
    sel = z[:, 0, :]
    return sel @ params["w_out"].T + params["b_out"]


def init_params(key, d_in, d_hidden, n_layers=N_LAYERS):
    D = d_hidden
    ks = jax.random.split(key, 16)

    def w(k, shape, s=0.1):
        return jax.random.normal(k, shape, jnp.float32) * s

    return dict(
        w_lin=w(ks[0], (D, d_in)),            b_lin=w(ks[1], (1, D)),
        w_in=w(ks[2], (n_layers, 3 * D, D)),  b_in=w(ks[3], (n_layers, 1, 3 * D)),
        w_op=w(ks[4], (n_layers, D, D)),      b_op=w(ks[5], (n_layers, 1, D)),
        w1=w(ks[6], (n_layers, D, D)),        b1=w(ks[7], (n_layers, 1, D)),
        w2=w(ks[8], (n_layers, D, D)),        b2=w(ks[9], (n_layers, 1, D)),
        ln1w=1.0 + w(ks[10], (n_layers, 1, D)), ln1b=w(ks[11], (n_layers, 1, D)),
        ln2w=1.0 + w(ks[12], (n_layers, 1, D)), ln2b=w(ks[13], (n_layers, 1, D)),
        w_out=w(ks[14], (d_in, D)),           b_out=w(ks[15], (1, d_in)),
    )


if __name__ == "__main__":
    B, S1, S2, d_in, d_hidden, n_heads = 8, 4, 4, 16, 32, 4
    key = jax.random.PRNGKey(0)
    kx, kt, kp = jax.random.split(key, 3)
    x = jax.random.normal(kx, (B, S1, d_in), jnp.float32)
    t = jax.random.normal(kt, (B, S2, d_hidden), jnp.float32)
    params = init_params(kp, d_in, d_hidden)

    out = jax.block_until_ready(transformer_forward(x, t, params, n_heads))
    ref = reference_forward(x, t, params, n_heads)

    assert out.shape == (B, d_in)
    # Tolerance covers bf16 MXU operands (f32 accumulation) + approx reciprocal.
    err = float(jnp.max(jnp.abs(out - ref)))
    assert err < 5e-2, f"kernel/reference mismatch: {err}"
    print("KERNEL_OK")
</pallas_src>

<mosaic_0001>
module attributes {stable_mosaic.version = 11 : i64} {
  func.func @transformer_kernel(%arg0: i32, %arg1: memref<8x16xf32, #tpu.memory_space<vmem>>, %arg2: memref<16x32xbf16, #tpu.memory_space<vmem>>, %arg3: memref<1x32xf32, #tpu.memory_space<vmem>>, %arg4: memref<1x32x96xbf16, #tpu.memory_space<vmem>>, %arg5: memref<1x1x96xf32, #tpu.memory_space<vmem>>, %arg6: memref<1x4x8x32xbf16, #tpu.memory_space<vmem>>, %arg7: memref<1x1x32xf32, #tpu.memory_space<vmem>>, %arg8: memref<1x32x32xbf16, #tpu.memory_space<vmem>>, %arg9: memref<1x1x32xf32, #tpu.memory_space<vmem>>, %arg10: memref<1x32x32xbf16, #tpu.memory_space<vmem>>, %arg11: memref<1x1x32xf32, #tpu.memory_space<vmem>>, %arg12: memref<1x1x32xf32, #tpu.memory_space<vmem>>, %arg13: memref<1x1x32xf32, #tpu.memory_space<vmem>>, %arg14: memref<1x1x32xf32, #tpu.memory_space<vmem>>, %arg15: memref<1x1x32xf32, #tpu.memory_space<vmem>>, %arg16: memref<32x128xbf16, #tpu.memory_space<vmem>>, %arg17: memref<1x128xf32, #tpu.memory_space<vmem>>, %arg18: memref<8x128xf32, #tpu.memory_space<vmem>>, %arg19: memref<8x32xf32, #tpu.memory_space<vmem>>) attributes {dimension_semantics = [#tpu.dimension_semantics<arbitrary>], iteration_bounds = array<i64: 2>, scalar_prefetch = 0 : i64, scratch_operands = 1 : i64, tpu.core_type = #tpu.core_type<tc>, window_params = [{pipeline_mode = #tpu.pipeline_mode<synchronous>, transform_indices = @transform_0, window_bounds = array<i64: 8, 16>}, {pipeline_mode = #tpu.pipeline_mode<synchronous>, transform_indices = @transform_1, window_bounds = array<i64: 16, 32>}, {pipeline_mode = #tpu.pipeline_mode<synchronous>, transform_indices = @transform_2, window_bounds = array<i64: 1, 32>}, {transform_indices = @transform_3, window_bounds = array<i64: 1, 32, 96>}, {transform_indices = @transform_4, window_bounds = array<i64: 1, 1, 96>}, {transform_indices = @transform_5, window_bounds = array<i64: 1, 4, 8, 32>}, {transform_indices = @transform_6, window_bounds = array<i64: 1, 1, 32>}, {transform_indices = @transform_7, window_bounds = array<i64: 1, 32, 32>}, {transform_indices = @transform_8, window_bounds = array<i64: 1, 1, 32>}, {transform_indices = @transform_9, window_bounds = array<i64: 1, 32, 32>}, {transform_indices = @transform_10, window_bounds = array<i64: 1, 1, 32>}, {transform_indices = @transform_11, window_bounds = array<i64: 1, 1, 32>}, {transform_indices = @transform_12, window_bounds = array<i64: 1, 1, 32>}, {transform_indices = @transform_13, window_bounds = array<i64: 1, 1, 32>}, {transform_indices = @transform_14, window_bounds = array<i64: 1, 1, 32>}, {pipeline_mode = #tpu.pipeline_mode<synchronous>, transform_indices = @transform_15, window_bounds = array<i64: 32, 128>}, {pipeline_mode = #tpu.pipeline_mode<synchronous>, transform_indices = @transform_16, window_bounds = array<i64: 1, 128>}, {pipeline_mode = #tpu.pipeline_mode<synchronous>, transform_indices = @transform_17, window_bounds = array<i64: 8, 128>}]} {
    %c0_i32 = arith.constant 0 : i32
    %0 = arith.cmpi eq, %arg0, %c0_i32 : i32
    %1 = arith.extui %0 : i1 to i32
    %c0_i32_0 = arith.constant 0 : i32
    %2 = arith.cmpi ne, %1, %c0_i32_0 : i32
    scf.if %2 {
      %c0_62 = arith.constant 0 : index
      %c0_63 = arith.constant 0 : index
      %142 = vector.load %arg1[%c0_62, %c0_63] : memref<8x16xf32, #tpu.memory_space<vmem>>, vector<8x16xf32>
      %143 = arith.truncf %142 : vector<8x16xf32> to vector<8x16xbf16>
      %c0_64 = arith.constant 0 : index
      %c0_65 = arith.constant 0 : index
      %144 = vector.load %arg2[%c0_64, %c0_65] : memref<16x32xbf16, #tpu.memory_space<vmem>>, vector<16x32xbf16>
      %cst_66 = arith.constant dense<0.000000e+00> : vector<8x32xf32>
      %145 = tpu.matmul %143, %144, %cst_66 {dimension_numbers = #tpu.dot_dimension_numbers<[1], [0], [0], [1], [0, 0, 1, 1], [], []>} : vector<8x16xbf16>, vector<16x32xbf16>, vector<8x32xf32> -> vector<8x32xf32>
      %c0_67 = arith.constant 0 : index
      %c0_68 = arith.constant 0 : index
      %146 = vector.load %arg3[%c0_67, %c0_68] : memref<1x32xf32, #tpu.memory_space<vmem>>, vector<1x32xf32>
      %147 = vector.broadcast %146 : vector<1x32xf32> to vector<8x32xf32>
      %148 = arith.addf %145, %147 : vector<8x32xf32>
      %c0_69 = arith.constant 0 : index
      %c0_70 = arith.constant 0 : index
      %149 = vector.load %arg19[%c0_69, %c0_70] : memref<8x32xf32, #tpu.memory_space<vmem>>, vector<8x32xf32>
      tpu.vector_store %arg19[%c0_69, %c0_70], %148 {strides = array<i32>} : memref<8x32xf32, #tpu.memory_space<vmem>>, vector<8x32xf32>,
    } else {
    }
    %c0 = arith.constant 0 : index
    %c0_1 = arith.constant 0 : index
    %3 = vector.load %arg19[%c0, %c0_1] : memref<8x32xf32, #tpu.memory_space<vmem>>, vector<8x32xf32>
    %4 = arith.truncf %3 : vector<8x32xf32> to vector<8x32xbf16>
    %c0_2 = arith.constant 0 : index
    %c0_3 = arith.constant 0 : index
    %c0_4 = arith.constant 0 : index
    %5 = vector.load %arg4[%c0_2, %c0_3, %c0_4] : memref<1x32x96xbf16, #tpu.memory_space<vmem>>, vector<1x32x96xbf16>
    %6 = vector.shape_cast %5 : vector<1x32x96xbf16> to vector<32x96xbf16>
    %cst = arith.constant dense<0.000000e+00> : vector<8x96xf32>
    %7 = tpu.matmul %4, %6, %cst {dimension_numbers = #tpu.dot_dimension_numbers<[1], [0], [0], [1], [0, 0, 1, 1], [], []>} : vector<8x32xbf16>, vector<32x96xbf16>, vector<8x96xf32> -> vector<8x96xf32>
    %c0_5 = arith.constant 0 : index
    %c0_6 = arith.constant 0 : index
    %c0_7 = arith.constant 0 : index
    %8 = vector.load %arg5[%c0_5, %c0_6, %c0_7] : memref<1x1x96xf32, #tpu.memory_space<vmem>>, vector<1x1x96xf32>
    %9 = vector.shape_cast %8 : vector<1x1x96xf32> to vector<1x96xf32>
    %10 = vector.broadcast %9 : vector<1x96xf32> to vector<8x96xf32>
    %11 = arith.addf %7, %10 : vector<8x96xf32>
    %12 = vector.extract_strided_slice %11 {offsets = [0, 0], sizes = [8, 8], strides = [1, 1]} : vector<8x96xf32> to vector<8x8xf32>
    %13 = vector.extract_strided_slice %11 {offsets = [0, 8], sizes = [8, 8], strides = [1, 1]} : vector<8x96xf32> to vector<8x8xf32>
    %14 = vector.extract_strided_slice %11 {offsets = [0, 16], sizes = [8, 8], strides = [1, 1]} : vector<8x96xf32> to vector<8x8xf32>
    %15 = vector.extract_strided_slice %11 {offsets = [0, 24], sizes = [8, 8], strides = [1, 1]} : vector<8x96xf32> to vector<8x8xf32>
    %16 = vector.shape_cast %12 : vector<8x8xf32> to vector<1x8x8xf32>
    %17 = vector.shape_cast %13 : vector<8x8xf32> to vector<1x8x8xf32>
    %18 = vector.shape_cast %14 : vector<8x8xf32> to vector<1x8x8xf32>
    %19 = vector.shape_cast %15 : vector<8x8xf32> to vector<1x8x8xf32>
    %20 = tpu.concatenate %16, %17, %18, %19 in 0 : vector<1x8x8xf32>, vector<1x8x8xf32>, vector<1x8x8xf32>, vector<1x8x8xf32> -> vector<4x8x8xf32>
    %21 = vector.extract_strided_slice %11 {offsets = [0, 32], sizes = [8, 8], strides = [1, 1]} : vector<8x96xf32> to vector<8x8xf32>
    %22 = vector.extract_strided_slice %11 {offsets = [0, 40], sizes = [8, 8], strides = [1, 1]} : vector<8x96xf32> to vector<8x8xf32>
    %23 = vector.extract_strided_slice %11 {offsets = [0, 48], sizes = [8, 8], strides = [1, 1]} : vector<8x96xf32> to vector<8x8xf32>
    %24 = vector.extract_strided_slice %11 {offsets = [0, 56], sizes = [8, 8], strides = [1, 1]} : vector<8x96xf32> to vector<8x8xf32>
    %25 = vector.shape_cast %21 : vector<8x8xf32> to vector<1x8x8xf32>
    %26 = vector.shape_cast %22 : vector<8x8xf32> to vector<1x8x8xf32>
    %27 = vector.shape_cast %23 : vector<8x8xf32> to vector<1x8x8xf32>
    %28 = vector.shape_cast %24 : vector<8x8xf32> to vector<1x8x8xf32>
    %29 = tpu.concatenate %25, %26, %27, %28 in 0 : vector<1x8x8xf32>, vector<1x8x8xf32>, vector<1x8x8xf32>, vector<1x8x8xf32> -> vector<4x8x8xf32>
    %30 = vector.extract_strided_slice %11 {offsets = [0, 64], sizes = [8, 8], strides = [1, 1]} : vector<8x96xf32> to vector<8x8xf32>
    %31 = vector.extract_strided_slice %11 {offsets = [0, 72], sizes = [8, 8], strides = [1, 1]} : vector<8x96xf32> to vector<8x8xf32>
    %32 = vector.extract_strided_slice %11 {offsets = [0, 80], sizes = [8, 8], strides = [1, 1]} : vector<8x96xf32> to vector<8x8xf32>
    %33 = vector.extract_strided_slice %11 {offsets = [0, 88], sizes = [8, 8], strides = [1, 1]} : vector<8x96xf32> to vector<8x8xf32>
    %34 = vector.shape_cast %30 : vector<8x8xf32> to vector<1x8x8xf32>
    %35 = vector.shape_cast %31 : vector<8x8xf32> to vector<1x8x8xf32>
    %36 = vector.shape_cast %32 : vector<8x8xf32> to vector<1x8x8xf32>
    %37 = vector.shape_cast %33 : vector<8x8xf32> to vector<1x8x8xf32>
    %38 = tpu.concatenate %34, %35, %36, %37 in 0 : vector<1x8x8xf32>, vector<1x8x8xf32>, vector<1x8x8xf32>, vector<1x8x8xf32> -> vector<4x8x8xf32>
    %cst_8 = arith.constant 0.353553385 : f32
    %39 = vector.broadcast %cst_8 : f32 to vector<4x8x8xf32>
    %40 = arith.mulf %20, %39 : vector<4x8x8xf32>
    %41 = arith.truncf %40 : vector<4x8x8xf32> to vector<4x8x8xbf16>
    %42 = arith.truncf %29 : vector<4x8x8xf32> to vector<4x8x8xbf16>
    %43 = arith.truncf %38 : vector<4x8x8xf32> to vector<4x8x8xbf16>
    "tpu.trace_start"() <{level = 10 : i32, message = "hqe,hke->hqk"}> : () -> ()
    %cst_9 = arith.constant dense<0.000000e+00> : vector<4x8x8xf32>
    %44 = tpu.matmul %41, %42, %cst_9 {dimension_numbers = #tpu.dot_dimension_numbers<[2], [2], [1], [1], [0, 0, 0, 1, 1, 1], [0], [0]>} : vector<4x8x8xbf16>, vector<4x8x8xbf16>, vector<4x8x8xf32> -> vector<4x8x8xf32>
    "tpu.trace_stop"() : () -> ()
    %cst_10 = arith.constant dense<0xFF800000> : vector<4x8xf32>
    %45 = vector.multi_reduction <maximumf>, %44, %cst_10 [2] : vector<4x8x8xf32> to vector<4x8xf32>
    %46 = vector.shape_cast %45 : vector<4x8xf32> to vector<4x8x1xf32>
    %47 = vector.broadcast %46 : vector<4x8x1xf32> to vector<4x8x8xf32>
    %48 = arith.subf %44, %47 : vector<4x8x8xf32>
    %49 = math.exp %48 : vector<4x8x8xf32>
    %cst_11 = arith.constant dense<0.000000e+00> : vector<4x8xf32>
    %50 = vector.multi_reduction <add>, %49, %cst_11 [2] : vector<4x8x8xf32> to vector<4x8xf32>
    %51 = vector.shape_cast %50 : vector<4x8xf32> to vector<4x8x1xf32>
    %52 = tpu.reciprocal %51 {approx = true} : vector<4x8x1xf32> -> vector<4x8x1xf32>
    %53 = vector.broadcast %52 : vector<4x8x1xf32> to vector<4x8x8xf32>
    %54 = arith.mulf %49, %53 : vector<4x8x8xf32>
    %55 = arith.truncf %54 : vector<4x8x8xf32> to vector<4x8x8xbf16>
    "tpu.trace_start"() <{level = 10 : i32, message = "hqk,hke->hqe"}> : () -> ()
    %cst_12 = arith.constant dense<0.000000e+00> : vector<4x8x8xf32>
    %56 = tpu.matmul %55, %43, %cst_12 {dimension_numbers = #tpu.dot_dimension_numbers<[2], [1], [1], [2], [0, 0, 0, 1, 1, 2], [0], [0]>} : vector<4x8x8xbf16>, vector<4x8x8xbf16>, vector<4x8x8xf32> -> vector<4x8x8xf32>
    "tpu.trace_stop"() : () -> ()
    %57 = arith.truncf %56 : vector<4x8x8xf32> to vector<4x8x8xbf16>
    %c0_13 = arith.constant 0 : index
    %c0_14 = arith.constant 0 : index
    %c0_15 = arith.constant 0 : index
    %c0_16 = arith.constant 0 : index
    %58 = vector.load %arg6[%c0_13, %c0_14, %c0_15, %c0_16] : memref<1x4x8x32xbf16, #tpu.memory_space<vmem>>, vector<1x4x8x32xbf16>
    %59 = vector.shape_cast %58 : vector<1x4x8x32xbf16> to vector<4x8x32xbf16>
    "tpu.trace_start"() <{level = 10 : i32, message = "hqe,hed->hqd"}> : () -> ()
    %cst_17 = arith.constant dense<0.000000e+00> : vector<4x8x32xf32>
    %60 = tpu.matmul %57, %59, %cst_17 {dimension_numbers = #tpu.dot_dimension_numbers<[2], [1], [1], [2], [0, 0, 0, 1, 1, 2], [0], [0]>} : vector<4x8x8xbf16>, vector<4x8x32xbf16>, vector<4x8x32xf32> -> vector<4x8x32xf32>
    "tpu.trace_stop"() : () -> ()
    %cst_18 = arith.constant dense<0.000000e+00> : vector<8x32xf32>
    %61 = vector.multi_reduction <add>, %60, %cst_18 [0] : vector<4x8x32xf32> to vector<8x32xf32>
    %c0_19 = arith.constant 0 : index
    %c0_20 = arith.constant 0 : index
    %c0_21 = arith.constant 0 : index
    %62 = vector.load %arg7[%c0_19, %c0_20, %c0_21] : memref<1x1x32xf32, #tpu.memory_space<vmem>>, vector<1x1x32xf32>
    %63 = vector.shape_cast %62 : vector<1x1x32xf32> to vector<1x32xf32>
    %64 = vector.broadcast %63 : vector<1x32xf32> to vector<8x32xf32>
    %65 = arith.addf %61, %64 : vector<8x32xf32>
    %66 = arith.addf %3, %65 : vector<8x32xf32>
    %c0_22 = arith.constant 0 : index
    %c0_23 = arith.constant 0 : index
    %c0_24 = arith.constant 0 : index
    %67 = vector.load %arg12[%c0_22, %c0_23, %c0_24] : memref<1x1x32xf32, #tpu.memory_space<vmem>>, vector<1x1x32xf32>
    %68 = vector.shape_cast %67 : vector<1x1x32xf32> to vector<1x32xf32>
    %c0_25 = arith.constant 0 : index
    %c0_26 = arith.constant 0 : index
    %c0_27 = arith.constant 0 : index
    %69 = vector.load %arg13[%c0_25, %c0_26, %c0_27] : memref<1x1x32xf32, #tpu.memory_space<vmem>>, vector<1x1x32xf32>
    %70 = vector.shape_cast %69 : vector<1x1x32xf32> to vector<1x32xf32>
    %cst_28 = arith.constant dense<0.000000e+00> : vector<8xf32>
    %71 = vector.multi_reduction <add>, %66, %cst_28 [1] : vector<8x32xf32> to vector<8xf32>
    %72 = vector.shape_cast %71 : vector<8xf32> to vector<8x1xf32>
    %cst_29 = arith.constant 3.200000e+01 : f32
    %73 = vector.broadcast %cst_29 : f32 to vector<8x1xf32>
    %74 = arith.divf %72, %73 : vector<8x1xf32>
    %75 = vector.broadcast %74 : vector<8x1xf32> to vector<8x32xf32>
    %76 = arith.subf %66, %75 : vector<8x32xf32>
    %77 = arith.mulf %76, %76 : vector<8x32xf32>
    %cst_30 = arith.constant dense<0.000000e+00> : vector<8xf32>
    %78 = vector.multi_reduction <add>, %77, %cst_30 [1] : vector<8x32xf32> to vector<8xf32>
    %79 = vector.shape_cast %78 : vector<8xf32> to vector<8x1xf32>
    %cst_31 = arith.constant 3.200000e+01 : f32
    %80 = vector.broadcast %cst_31 : f32 to vector<8x1xf32>
    %81 = arith.divf %79, %80 : vector<8x1xf32>
    %82 = vector.broadcast %74 : vector<8x1xf32> to vector<8x32xf32>
    %83 = arith.subf %66, %82 : vector<8x32xf32>
    %cst_32 = arith.constant 9.99999974E-6 : f32
    %84 = vector.broadcast %cst_32 : f32 to vector<8x1xf32>
    %85 = arith.addf %81, %84 : vector<8x1xf32>
    %86 = math.rsqrt %85 : vector<8x1xf32>
    %87 = vector.broadcast %86 : vector<8x1xf32> to vector<8x32xf32>
    %88 = arith.mulf %83, %87 : vector<8x32xf32>
    %89 = vector.broadcast %68 : vector<1x32xf32> to vector<8x32xf32>
    %90 = arith.mulf %88, %89 : vector<8x32xf32>
    %91 = vector.broadcast %70 : vector<1x32xf32> to vector<8x32xf32>
    %92 = arith.addf %90, %91 : vector<8x32xf32>
    %93 = arith.truncf %92 : vector<8x32xf32> to vector<8x32xbf16>
    %c0_33 = arith.constant 0 : index
    %c0_34 = arith.constant 0 : index
    %c0_35 = arith.constant 0 : index
    %94 = vector.load %arg8[%c0_33, %c0_34, %c0_35] : memref<1x32x32xbf16, #tpu.memory_space<vmem>>, vector<1x32x32xbf16>
    %95 = vector.shape_cast %94 : vector<1x32x32xbf16> to vector<32x32xbf16>
    %cst_36 = arith.constant dense<0.000000e+00> : vector<8x32xf32>
    %96 = tpu.matmul %93, %95, %cst_36 {dimension_numbers = #tpu.dot_dimension_numbers<[1], [0], [0], [1], [0, 0, 1, 1], [], []>} : vector<8x32xbf16>, vector<32x32xbf16>, vector<8x32xf32> -> vector<8x32xf32>
    %c0_37 = arith.constant 0 : index
    %c0_38 = arith.constant 0 : index
    %c0_39 = arith.constant 0 : index
    %97 = vector.load %arg9[%c0_37, %c0_38, %c0_39] : memref<1x1x32xf32, #tpu.memory_space<vmem>>, vector<1x1x32xf32>
    %98 = vector.shape_cast %97 : vector<1x1x32xf32> to vector<1x32xf32>
    %99 = vector.broadcast %98 : vector<1x32xf32> to vector<8x32xf32>
    %100 = arith.addf %96, %99 : vector<8x32xf32>
    %cst_40 = arith.constant 0.000000e+00 : f32
    %101 = vector.broadcast %cst_40 : f32 to vector<8x32xf32>
    %102 = arith.maximumf %100, %101 : vector<8x32xf32>
    %103 = arith.truncf %102 : vector<8x32xf32> to vector<8x32xbf16>
    %c0_41 = arith.constant 0 : index
    %c0_42 = arith.constant 0 : index
    %c0_43 = arith.constant 0 : index
    %104 = vector.load %arg10[%c0_41, %c0_42, %c0_43] : memref<1x32x32xbf16, #tpu.memory_space<vmem>>, vector<1x32x32xbf16>
    %105 = vector.shape_cast %104 : vector<1x32x32xbf16> to vector<32x32xbf16>
    %cst_44 = arith.constant dense<0.000000e+00> : vector<8x32xf32>
    %106 = tpu.matmul %103, %105, %cst_44 {dimension_numbers = #tpu.dot_dimension_numbers<[1], [0], [0], [1], [0, 0, 1, 1], [], []>} : vector<8x32xbf16>, vector<32x32xbf16>, vector<8x32xf32> -> vector<8x32xf32>
    %c0_45 = arith.constant 0 : index
    %c0_46 = arith.constant 0 : index
    %c0_47 = arith.constant 0 : index
    %107 = vector.load %arg11[%c0_45, %c0_46, %c0_47] : memref<1x1x32xf32, #tpu.memory_space<vmem>>, vector<1x1x32xf32>
    %108 = vector.shape_cast %107 : vector<1x1x32xf32> to vector<1x32xf32>
    %109 = vector.broadcast %108 : vector<1x32xf32> to vector<8x32xf32>
    %110 = arith.addf %106, %109 : vector<8x32xf32>
    %111 = arith.addf %92, %110 : vector<8x32xf32>
    %c0_48 = arith.constant 0 : index
    %c0_49 = arith.constant 0 : index
    %c0_50 = arith.constant 0 : index
    %112 = vector.load %arg14[%c0_48, %c0_49, %c0_50] : memref<1x1x32xf32, #tpu.memory_space<vmem>>, vector<1x1x32xf32>
    %113 = vector.shape_cast %112 : vector<1x1x32xf32> to vector<1x32xf32>
    %c0_51 = arith.constant 0 : index
    %c0_52 = arith.constant 0 : index
    %c0_53 = arith.constant 0 : index
    %114 = vector.load %arg15[%c0_51, %c0_52, %c0_53] : memref<1x1x32xf32, #tpu.memory_space<vmem>>, vector<1x1x32xf32>
    %115 = vector.shape_cast %114 : vector<1x1x32xf32> to vector<1x32xf32>
    %cst_54 = arith.constant dense<0.000000e+00> : vector<8xf32>
    %116 = vector.multi_reduction <add>, %111, %cst_54 [1] : vector<8x32xf32> to vector<8xf32>
    %117 = vector.shape_cast %116 : vector<8xf32> to vector<8x1xf32>
    %cst_55 = arith.constant 3.200000e+01 : f32
    %118 = vector.broadcast %cst_55 : f32 to vector<8x1xf32>
    %119 = arith.divf %117, %118 : vector<8x1xf32>
    %120 = vector.broadcast %119 : vector<8x1xf32> to vector<8x32xf32>
    %121 = arith.subf %111, %120 : vector<8x32xf32>
    %122 = arith.mulf %121, %121 : vector<8x32xf32>
    %cst_56 = arith.constant dense<0.000000e+00> : vector<8xf32>
    %123 = vector.multi_reduction <add>, %122, %cst_56 [1] : vector<8x32xf32> to vector<8xf32>
    %124 = vector.shape_cast %123 : vector<8xf32> to vector<8x1xf32>
    %cst_57 = arith.constant 3.200000e+01 : f32
    %125 = vector.broadcast %cst_57 : f32 to vector<8x1xf32>
    %126 = arith.divf %124, %125 : vector<8x1xf32>
    %127 = vector.broadcast %119 : vector<8x1xf32> to vector<8x32xf32>
    %128 = arith.subf %111, %127 : vector<8x32xf32>
    %cst_58 = arith.constant 9.99999974E-6 : f32
    %129 = vector.broadcast %cst_58 : f32 to vector<8x1xf32>
    %130 = arith.addf %126, %129 : vector<8x1xf32>
    %131 = math.rsqrt %130 : vector<8x1xf32>
    %132 = vector.broadcast %131 : vector<8x1xf32> to vector<8x32xf32>
    %133 = arith.mulf %128, %132 : vector<8x32xf32>
    %134 = vector.broadcast %113 : vector<1x32xf32> to vector<8x32xf32>
    %135 = arith.mulf %133, %134 : vector<8x32xf32>
    %136 = vector.broadcast %115 : vector<1x32xf32> to vector<8x32xf32>
    %137 = arith.addf %135, %136 : vector<8x32xf32>
    %c0_59 = arith.constant 0 : index
    %c0_60 = arith.constant 0 : index
    %138 = vector.load %arg19[%c0_59, %c0_60] : memref<8x32xf32, #tpu.memory_space<vmem>>, vector<8x32xf32>
    tpu.vector_store %arg19[%c0_59, %c0_60], %137 {strides = array<i32>} : memref<8x32xf32, #tpu.memory_space<vmem>>, vector<8x32xf32>,
    %c1_i32 = arith.constant 1 : i32
    %139 = arith.cmpi eq, %arg0, %c1_i32 : i32
    %140 = arith.extui %139 : i1 to i32
    %c0_i32_61 = arith.constant 0 : i32
    %141 = arith.cmpi ne, %140, %c0_i32_61 : i32
    scf.if %141 {
      %142 = arith.truncf %137 : vector<8x32xf32> to vector<8x32xbf16>
      %c0_62 = arith.constant 0 : index
      %c0_63 = arith.constant 0 : index
      %143 = vector.load %arg16[%c0_62, %c0_63] : memref<32x128xbf16, #tpu.memory_space<vmem>>, vector<32x128xbf16>
      %cst_64 = arith.constant dense<0.000000e+00> : vector<8x128xf32>
      %144 = tpu.matmul %142, %143, %cst_64 {dimension_numbers = #tpu.dot_dimension_numbers<[1], [0], [0], [1], [0, 0, 1, 1], [], []>} : vector<8x32xbf16>, vector<32x128xbf16>, vector<8x128xf32> -> vector<8x128xf32>
      %c0_65 = arith.constant 0 : index
      %c0_66 = arith.constant 0 : index
      %145 = vector.load %arg17[%c0_65, %c0_66] : memref<1x128xf32, #tpu.memory_space<vmem>>, vector<1x128xf32>
      %146 = vector.broadcast %145 : vector<1x128xf32> to vector<8x128xf32>
      %147 = arith.addf %144, %146 : vector<8x128xf32>
      %c0_67 = arith.constant 0 : index
      %c0_68 = arith.constant 0 : index
      %148 = vector.load %arg18[%c0_67, %c0_68] : memref<8x128xf32, #tpu.memory_space<vmem>>, vector<8x128xf32>
      tpu.vector_store %arg18[%c0_67, %c0_68], %147 {strides = array<i32>} : memref<8x128xf32, #tpu.memory_space<vmem>>, vector<8x128xf32>,
    } else {
    }
    return
  }
  func.func @transform_0(%arg0: i32) -> (i32, i32) {
    %c0_i32 = arith.constant 0 : i32
    %c0_i32_0 = arith.constant 0 : i32
    %c0_i32_1 = arith.constant 0 : i32
    return %c0_i32, %c0_i32_0 : i32, i32
  }
  func.func @transform_1(%arg0: i32) -> (i32, i32) {
    %c0_i32 = arith.constant 0 : i32
    %c0_i32_0 = arith.constant 0 : i32
    %c0_i32_1 = arith.constant 0 : i32
    return %c0_i32, %c0_i32_0 : i32, i32
  }
  func.func @transform_2(%arg0: i32) -> (i32, i32) {
    %c0_i32 = arith.constant 0 : i32
    %c0_i32_0 = arith.constant 0 : i32
    %c0_i32_1 = arith.constant 0 : i32
    return %c0_i32, %c0_i32_0 : i32, i32
  }
  func.func @transform_3(%arg0: i32) -> (i32, i32, i32) {
    %c0_i32 = arith.constant 0 : i32
    %c0_i32_0 = arith.constant 0 : i32
    %c0_i32_1 = arith.constant 0 : i32
    return %arg0, %c0_i32, %c0_i32_0 : i32, i32, i32
  }
  func.func @transform_4(%arg0: i32) -> (i32, i32, i32) {
    %c0_i32 = arith.constant 0 : i32
    %c0_i32_0 = arith.constant 0 : i32
    %c0_i32_1 = arith.constant 0 : i32
    return %arg0, %c0_i32, %c0_i32_0 : i32, i32, i32
  }
  func.func @transform_5(%arg0: i32) -> (i32, i32, i32, i32) {
    %c0_i32 = arith.constant 0 : i32
    %c0_i32_0 = arith.constant 0 : i32
    %c0_i32_1 = arith.constant 0 : i32
    %c0_i32_2 = arith.constant 0 : i32
    return %arg0, %c0_i32, %c0_i32_0, %c0_i32_1 : i32, i32, i32, i32
  }
  func.func @transform_6(%arg0: i32) -> (i32, i32, i32) {
    %c0_i32 = arith.constant 0 : i32
    %c0_i32_0 = arith.constant 0 : i32
    %c0_i32_1 = arith.constant 0 : i32
    return %arg0, %c0_i32, %c0_i32_0 : i32, i32, i32
  }
  func.func @transform_7(%arg0: i32) -> (i32, i32, i32) {
    %c0_i32 = arith.constant 0 : i32
    %c0_i32_0 = arith.constant 0 : i32
    %c0_i32_1 = arith.constant 0 : i32
    return %arg0, %c0_i32, %c0_i32_0 : i32, i32, i32
  }
  func.func @transform_8(%arg0: i32) -> (i32, i32, i32) {
    %c0_i32 = arith.constant 0 : i32
    %c0_i32_0 = arith.constant 0 : i32
    %c0_i32_1 = arith.constant 0 : i32
    return %arg0, %c0_i32, %c0_i32_0 : i32, i32, i32
  }
  func.func @transform_9(%arg0: i32) -> (i32, i32, i32) {
    %c0_i32 = arith.constant 0 : i32
    %c0_i32_0 = arith.constant 0 : i32
    %c0_i32_1 = arith.constant 0 : i32
    return %arg0, %c0_i32, %c0_i32_0 : i32, i32, i32
  }
  func.func @transform_10(%arg0: i32) -> (i32, i32, i32) {
    %c0_i32 = arith.constant 0 : i32
    %c0_i32_0 = arith.constant 0 : i32
    %c0_i32_1 = arith.constant 0 : i32
    return %arg0, %c0_i32, %c0_i32_0 : i32, i32, i32
  }
  func.func @transform_11(%arg0: i32) -> (i32, i32, i32) {
    %c0_i32 = arith.constant 0 : i32
    %c0_i32_0 = arith.constant 0 : i32
    %c0_i32_1 = arith.constant 0 : i32
    return %arg0, %c0_i32, %c0_i32_0 : i32, i32, i32
  }
  func.func @transform_12(%arg0: i32) -> (i32, i32, i32) {
    %c0_i32 = arith.constant 0 : i32
    %c0_i32_0 = arith.constant 0 : i32
    %c0_i32_1 = arith.constant 0 : i32
    return %arg0, %c0_i32, %c0_i32_0 : i32, i32, i32
  }
  func.func @transform_13(%arg0: i32) -> (i32, i32, i32) {
    %c0_i32 = arith.constant 0 : i32
    %c0_i32_0 = arith.constant 0 : i32
    %c0_i32_1 = arith.constant 0 : i32
    return %arg0, %c0_i32, %c0_i32_0 : i32, i32, i32
  }
  func.func @transform_14(%arg0: i32) -> (i32, i32, i32) {
    %c0_i32 = arith.constant 0 : i32
    %c0_i32_0 = arith.constant 0 : i32
    %c0_i32_1 = arith.constant 0 : i32
    return %arg0, %c0_i32, %c0_i32_0 : i32, i32, i32
  }
  func.func @transform_15(%arg0: i32) -> (i32, i32) {
    %c0_i32 = arith.constant 0 : i32
    %c0_i32_0 = arith.constant 0 : i32
    %c0_i32_1 = arith.constant 0 : i32
    return %c0_i32, %c0_i32_0 : i32, i32
  }
  func.func @transform_16(%arg0: i32) -> (i32, i32) {
    %c0_i32 = arith.constant 0 : i32
    %c0_i32_0 = arith.constant 0 : i32
    %c0_i32_1 = arith.constant 0 : i32
    return %c0_i32, %c0_i32_0 : i32, i32
  }
  func.func @transform_17(%arg0: i32) -> (i32, i32) {
    %c0_i32 = arith.constant 0 : i32
    %c0_i32_0 = arith.constant 0 : i32
    %c0_i32_1 = arith.constant 0 : i32
    return %c0_i32, %c0_i32_0 : i32, i32
  }
}

</mosaic_0001>

<llo_original>
// kernel: tpu_custom_call.1
$region0: #{tpu_custom_call.1}
  #allocation0 [shape = 'u32[]', space=smem, size = 0x4, offset = 0x4, fixed_abs, tag = 'smem constant byte address 0x4 - core index']
  #allocation1 [shape = 'u32[72,128]{1,0:T(1,128)}', space=vmem, size = 0x9000, scoped, tag = 'internal scratch']
  #allocation2 [shape = 'f32[8,32]{1,0:T(8,128)}', space=vmem, size = 0x1000, scoped, tag = 'scratch operand']
  %s0 = inlined_call_operand.hbm [shape: f32[8,16], index: 0, kind: input, shape index: {}]
  %s1 = inlined_call_operand.hbm [shape: bf16[16,32], index: 1, kind: input, shape index: {}]
  %s2 = inlined_call_operand.hbm [shape: f32[1,32], index: 2, kind: input, shape index: {}]
  %s3 = inlined_call_operand.hbm [shape: bf16[2,32,96], index: 3, kind: input, shape index: {}]
  %s4 = inlined_call_operand.vmem [shape: f32[2,1,96], index: 4, kind: input, shape index: {}]
  %s5 = inlined_call_operand.hbm [shape: bf16[2,4,8,32], index: 5, kind: input, shape index: {}]
  %s6 = inlined_call_operand.vmem [shape: f32[2,1,32], index: 6, kind: input, shape index: {}]
  %s7 = inlined_call_operand.hbm [shape: bf16[2,32,32], index: 7, kind: input, shape index: {}]
  %s8 = inlined_call_operand.vmem [shape: f32[2,1,32], index: 8, kind: input, shape index: {}]
  %s9 = inlined_call_operand.hbm [shape: bf16[2,32,32], index: 9, kind: input, shape index: {}]
  %s10 = inlined_call_operand.vmem [shape: f32[2,1,32], index: 10, kind: input, shape index: {}]
  %s11 = inlined_call_operand.vmem [shape: f32[2,1,32], index: 11, kind: input, shape index: {}]
  %s12 = inlined_call_operand.hbm [shape: f32[2,1,32], index: 12, kind: input, shape index: {}]
  %s13 = inlined_call_operand.vmem [shape: f32[2,1,32], index: 13, kind: input, shape index: {}]
  %s14 = inlined_call_operand.hbm [shape: f32[2,1,32], index: 14, kind: input, shape index: {}]
  %s15 = inlined_call_operand.hbm [shape: bf16[32,128], index: 15, kind: input, shape index: {}]
  %s16 = inlined_call_operand.vmem [shape: f32[1,128], index: 16, kind: input, shape index: {}]
  %s17 = inlined_call_operand.hbm [shape: f32[8,128], index: 17, kind: output, shape index: {}]
  %s18 = sld [smem:[#allocation0]]
  $region149: #{tpu_custom_call.1} parent=0
    _
  %s20 = ssub.s32 1, %s18
  %s21 = scalar_select 0, %s20, %s18
  $region1: #{tpu_custom_call.1} parent=0
    #allocation3 [shape = 'u8[4096]{0}', space=vmem, size = 0x1000, scoped, tag = 'input window, operand 0, single buffered']
    #allocation4 [shape = 's32[2]{0}', space=sflag, size = 0x8, scoped, tag = 'scoped memory for tpu_custom_call.1']
    #allocation5 [shape = 's32[2]{0}', space=sflag, size = 0x8, scoped, tag = 'scoped memory for tpu_custom_call.1']
    #allocation6 [shape = 'u8[4096]{0}', space=vmem, size = 0x1000, scoped, tag = 'input window, operand 1, single buffered']
    #allocation7 [shape = 's32[1]{0}', space=sflag, size = 0x4, scoped, tag = 'scoped memory for tpu_custom_call.1']
    #allocation8 [shape = 'u8[512]{0}', space=vmem, size = 0x400, scoped, tag = 'input window, operand 2, single buffered']
    #allocation9 [shape = 'u8[16384]{0}', space=vmem, size = 0x4000, scoped, tag = 'input window, operand 3']
    #allocation10 [shape = 's32[2]{0}', space=sflag, size = 0x8, scoped, tag = 'scoped memory for tpu_custom_call.1']
    #allocation11 [shape = 'u8[16384]{0}', space=vmem, size = 0x4000, scoped, tag = 'input window, operand 5']
    #allocation12 [shape = 'u8[16384]{0}', space=vmem, size = 0x4000, scoped, tag = 'input window, operand 7']
    #allocation13 [shape = 's32[2]{0}', space=sflag, size = 0x8, scoped, tag = 'scoped memory for tpu_custom_call.1']
    #allocation14 [shape = 'u8[16384]{0}', space=vmem, size = 0x4000, scoped, tag = 'input window, operand 9']
    #allocation15 [shape = 'u8[1024]{0}', space=vmem, size = 0x400, scoped, tag = 'input window, operand 12']
    #allocation16 [shape = 's32[2]{0}', space=sflag, size = 0x8, scoped, tag = 'scoped memory for tpu_custom_call.1']
    #allocation17 [shape = 'u8[1024]{0}', space=vmem, size = 0x400, scoped, tag = 'input window, operand 14']
    #allocation18 [shape = 'u8[8192]{0}', space=vmem, size = 0x2000, scoped, tag = 'input window, operand 15, single buffered']
    #allocation19 [shape = 's32[1]{0}', space=sflag, size = 0x4, scoped, tag = 'scoped memory for tpu_custom_call.1']
    #allocation20 [shape = 'u8[4096]{0}', space=vmem, size = 0x1000, scoped, tag = 'output window, operand 0, single buffered']
    %22 = vsyncpa [#allocation4], 0
    %23 = vsyncpa [#allocation7], 0
    %24 = vsyncpa [#allocation10], 0
    %s25 = scalar_lea.sflag [#allocation10], 1
    %26 = vsyncpa %s25, 0
    %27 = vsyncpa [#allocation13], 0
    %s28 = scalar_lea.sflag [#allocation13], 1
    %29 = vsyncpa %s28, 0
    %30 = vsyncpa [#allocation16], 0
    %s31 = scalar_lea.sflag [#allocation16], 1
    %32 = vsyncpa %s31, 0
    %33 = vsyncpa [#allocation19], 0
    %34 = vsyncpa [#allocation5], 0
    loop: start=0, step=1, limit=4
    $region2: #{tpu_custom_call.1} parent=1 // loop_pre_header
      _
    $region3: #{tpu_custom_call.1} parent=1 // loop_header
      %s36 = sphi 0, %s40
      %p37 = scmp.ge.s32.totalorder %s36, 4
      %s44 = sphi 0, %s44
      %s46 = sphi 0, %s44
      %s47 = sphi 0, %s46
      %s61 = sphi 0, %s47
      %s65 = sphi 0, %s65
      %s67 = sphi 0, %s65
      %s68 = sphi 0, %s67
      %s82 = sphi 0, %s68
      %s86 = sphi 0, %s86
      %s88 = sphi 0, %s86
      %s89 = sphi 0, %s88
      %s103 = sphi 0, %s89
      %s109 = sphi 0, %s111
      %s112 = sphi 0, %s109
      %s113 = sphi 0, %s112
      %s129 = sphi 0, %s113
      %s135 = sphi 0, %s137
      %s138 = sphi 0, %s135
      %s139 = sphi 0, %s138
      %s155 = sphi 0, %s139
      %s161 = sphi 0, %s163
      %s164 = sphi 0, %s161
      %s165 = sphi 0, %s164
      %s181 = sphi 0, %s165
      %s187 = sphi 0, %s189
      %s190 = sphi 0, %s187
      %s191 = sphi 0, %s190
      %s207 = sphi 0, %s191
      %s213 = sphi 0, %s215
      %s216 = sphi 0, %s213
      %s217 = sphi 0, %s216
      %s233 = sphi 0, %s217
      %s239 = sphi 0, %s241
      %s242 = sphi 0, %s239
      %s243 = sphi 0, %s242
      %s259 = sphi 0, %s243
      %s265 = sphi 0, %s267
      %s268 = sphi 0, %s265
      %s269 = sphi 0, %s268
      %s285 = sphi 0, %s269
      %s291 = sphi 0, %s293
      %s294 = sphi 0, %s291
      %s295 = sphi 0, %s294
      %s311 = sphi 0, %s295
      %s317 = sphi 0, %s319
      %s320 = sphi 0, %s317
      %s321 = sphi 0, %s320
      %s337 = sphi 0, %s321
      %s343 = sphi 0, %s345
      %s346 = sphi 0, %s343
      %s347 = sphi 0, %s346
      %s363 = sphi 0, %s347
      %s369 = sphi 0, %s371
      %s372 = sphi 0, %s369
      %s373 = sphi 0, %s372
      %s389 = sphi 0, %s373
      %s395 = sphi 0, %s397
      %s398 = sphi 0, %s395
      %s399 = sphi 0, %s398
      %s415 = sphi 0, %s399
      %s419 = sphi 0, %s419
      %s421 = sphi 0, %s419
      %s422 = sphi 0, %s421
      %s436 = sphi 0, %s422
      %s440 = sphi 0, %s440
      %s442 = sphi 0, %s440
      %s443 = sphi 0, %s442
      %s457 = sphi 0, %s443
      %s461 = sphi 0, %s461
      %s463 = sphi 0, %s461
      %s464 = sphi 0, %s463
      %s478 = sphi 0, %s464
    $region4: #{tpu_custom_call.1} parent=1 // loop_header_branch
      %39 = sbr.rel (%p37) target = $region8
    $region5: #{tpu_custom_call.1} parent=1 // loop_body
      %s41 = ssub.s32 %s36, 1
      %s42 = ssub.s32 %s36, 2
      %s43 = sadd.s32 %s36, 1
      %s45 = sadd.s32 %s44, 1
      %p48 = scmp.eq.s32.totalorder %s36, 1
      %p49 = scmp.ne.s32.totalorder %s44, %s46
      %p50 = scmp.eq.s32.totalorder %s36, 0
      %p51 = por %p49, %p50
      %p52 = scmp.ne.s32.totalorder %s44, %s46
      %p53 = scmp.eq.s32.totalorder %s41, 1
      %p54 = por %p52, %p53
      %p55 = scmp.ne.s32.totalorder %s46, %s47
      %p56 = scmp.eq.s32.totalorder %s41, 0
      %p57 = por %p55, %p56
      %p58 = scmp.ne.s32.totalorder %s46, %s47
      %p59 = scmp.eq.s32.totalorder %s42, 1
      %p60 = por %p58, %p59
      %p62 = scmp.ne.s32.totalorder %s47, %s61
      %p63 = scmp.eq.s32.totalorder %s42, 0
      %p64 = por %p62, %p63
      %s66 = sadd.s32 %s65, 1
      %p69 = scmp.eq.s32.totalorder %s36, 1
      %p70 = scmp.ne.s32.totalorder %s65, %s67
      %p71 = scmp.eq.s32.totalorder %s36, 0
      %p72 = por %p70, %p71
      %p73 = scmp.ne.s32.totalorder %s65, %s67
      %p74 = scmp.eq.s32.totalorder %s41, 1
      %p75 = por %p73, %p74
      %p76 = scmp.ne.s32.totalorder %s67, %s68
      %p77 = scmp.eq.s32.totalorder %s41, 0
      %p78 = por %p76, %p77
      %p79 = scmp.ne.s32.totalorder %s67, %s68
      %p80 = scmp.eq.s32.totalorder %s42, 1
      %p81 = por %p79, %p80
      %p83 = scmp.ne.s32.totalorder %s68, %s82
      %p84 = scmp.eq.s32.totalorder %s42, 0
      %p85 = por %p83, %p84
      %s87 = sadd.s32 %s86, 1
      %p90 = scmp.eq.s32.totalorder %s36, 1
      %p91 = scmp.ne.s32.totalorder %s86, %s88
      %p92 = scmp.eq.s32.totalorder %s36, 0
      %p93 = por %p91, %p92
      %p94 = scmp.ne.s32.totalorder %s86, %s88
      %p95 = scmp.eq.s32.totalorder %s41, 1
      %p96 = por %p94, %p95
      %p97 = scmp.ne.s32.totalorder %s88, %s89
      %p98 = scmp.eq.s32.totalorder %s41, 0
      %p99 = por %p97, %p98
      %p100 = scmp.ne.s32.totalorder %s88, %s89
      %p101 = scmp.eq.s32.totalorder %s42, 1
      %p102 = por %p100, %p101
      %p104 = scmp.ne.s32.totalorder %s89, %s103
      %p105 = scmp.eq.s32.totalorder %s42, 0
      %p106 = por %p104, %p105
      %s107 = ssub.s32 %s36, %s43
      %p108 = scmp.eq.s32.totalorder %s107, 0
      %s110 = sadd.s32 %s109, 1
      %s111 = scalar_select %p108, %s109, %s110
      %p114 = pneg %p108
      %p115 = scmp.eq.s32.totalorder %s36, 1
      %p116 = por %p114, %p115
      %p117 = scmp.ne.s32.totalorder %s109, %s112
      %p118 = scmp.eq.s32.totalorder %s36, 0
      %p119 = por %p117, %p118
      %p120 = scmp.ne.s32.totalorder %s109, %s112
      %p121 = scmp.eq.s32.totalorder %s41, 1
      %p122 = por %p120, %p121
      %p123 = scmp.ne.s32.totalorder %s112, %s113
      %p124 = scmp.eq.s32.totalorder %s41, 0
      %p125 = por %p123, %p124
      %p126 = scmp.ne.s32.totalorder %s112, %s113
      %p127 = scmp.eq.s32.totalorder %s42, 1
      %p128 = por %p126, %p127
      %p130 = scmp.ne.s32.totalorder %s113, %s129
      %p131 = scmp.eq.s32.totalorder %s42, 0
      %p132 = por %p130, %p131
      %s133 = ssub.s32 %s36, %s43
      %p134 = scmp.eq.s32.totalorder %s133, 0
      %s136 = sadd.s32 %s135, 1
      %s137 = scalar_select %p134, %s135, %s136
      %p140 = pneg %p134
      %p141 = scmp.eq.s32.totalorder %s36, 1
      %p142 = por %p140, %p141
      %p143 = scmp.ne.s32.totalorder %s135, %s138
      %p144 = scmp.eq.s32.totalorder %s36, 0
      %p145 = por %p143, %p144
      %p146 = scmp.ne.s32.totalorder %s135, %s138
      %p147 = scmp.eq.s32.totalorder %s41, 1
      %p148 = por %p146, %p147
      %p149 = scmp.ne.s32.totalorder %s138, %s139
      %p150 = scmp.eq.s32.totalorder %s41, 0
      %p151 = por %p149, %p150
      %p152 = scmp.ne.s32.totalorder %s138, %s139
      %p153 = scmp.eq.s32.totalorder %s42, 1
      %p154 = por %p152, %p153
      %p156 = scmp.ne.s32.totalorder %s139, %s155
      %p157 = scmp.eq.s32.totalorder %s42, 0
      %p158 = por %p156, %p157
      %s159 = ssub.s32 %s36, %s43
      %p160 = scmp.eq.s32.totalorder %s159, 0
      %s162 = sadd.s32 %s161, 1
      %s163 = scalar_select %p160, %s161, %s162
      %p166 = pneg %p160
      %p167 = scmp.eq.s32.totalorder %s36, 1
      %p168 = por %p166, %p167
      %p169 = scmp.ne.s32.totalorder %s161, %s164
      %p170 = scmp.eq.s32.totalorder %s36, 0
      %p171 = por %p169, %p170
      %p172 = scmp.ne.s32.totalorder %s161, %s164
      %p173 = scmp.eq.s32.totalorder %s41, 1
      %p174 = por %p172, %p173
      %p175 = scmp.ne.s32.totalorder %s164, %s165
      %p176 = scmp.eq.s32.totalorder %s41, 0
      %p177 = por %p175, %p176
      %p178 = scmp.ne.s32.totalorder %s164, %s165
      %p179 = scmp.eq.s32.totalorder %s42, 1
      %p180 = por %p178, %p179
      %p182 = scmp.ne.s32.totalorder %s165, %s181
      %p183 = scmp.eq.s32.totalorder %s42, 0
      %p184 = por %p182, %p183
      %s185 = ssub.s32 %s36, %s43
      %p186 = scmp.eq.s32.totalorder %s185, 0
      %s188 = sadd.s32 %s187, 1
      %s189 = scalar_select %p186, %s187, %s188
      %p192 = pneg %p186
      %p193 = scmp.eq.s32.totalorder %s36, 1
      %p194 = por %p192, %p193
      %p195 = scmp.ne.s32.totalorder %s187, %s190
      %p196 = scmp.eq.s32.totalorder %s36, 0
      %p197 = por %p195, %p196
      %p198 = scmp.ne.s32.totalorder %s187, %s190
      %p199 = scmp.eq.s32.totalorder %s41, 1
      %p200 = por %p198, %p199
      %p201 = scmp.ne.s32.totalorder %s190, %s191
      %p202 = scmp.eq.s32.totalorder %s41, 0
      %p203 = por %p201, %p202
      %p204 = scmp.ne.s32.totalorder %s190, %s191
      %p205 = scmp.eq.s32.totalorder %s42, 1
      %p206 = por %p204, %p205
      %p208 = scmp.ne.s32.totalorder %s191, %s207
      %p209 = scmp.eq.s32.totalorder %s42, 0
      %p210 = por %p208, %p209
      %s211 = ssub.s32 %s36, %s43
      %p212 = scmp.eq.s32.totalorder %s211, 0
      %s214 = sadd.s32 %s213, 1
      %s215 = scalar_select %p212, %s213, %s214
      %p218 = pneg %p212
      %p219 = scmp.eq.s32.totalorder %s36, 1
      %p220 = por %p218, %p219
      %p221 = scmp.ne.s32.totalorder %s213, %s216
      %p222 = scmp.eq.s32.totalorder %s36, 0
      %p223 = por %p221, %p222
      %p224 = scmp.ne.s32.totalorder %s213, %s216
      %p225 = scmp.eq.s32.totalorder %s41, 1
      %p226 = por %p224, %p225
      %p227 = scmp.ne.s32.totalorder %s216, %s217
      %p228 = scmp.eq.s32.totalorder %s41, 0
      %p229 = por %p227, %p228
      %p230 = scmp.ne.s32.totalorder %s216, %s217
      %p231 = scmp.eq.s32.totalorder %s42, 1
      %p232 = por %p230, %p231
      %p234 = scmp.ne.s32.totalorder %s217, %s233
      %p235 = scmp.eq.s32.totalorder %s42, 0
      %p236 = por %p234, %p235
      %s237 = ssub.s32 %s36, %s43
      %p238 = scmp.eq.s32.totalorder %s237, 0
      %s240 = sadd.s32 %s239, 1
      %s241 = scalar_select %p238, %s239, %s240
      %p244 = pneg %p238
      %p245 = scmp.eq.s32.totalorder %s36, 1
      %p246 = por %p244, %p245
      %p247 = scmp.ne.s32.totalorder %s239, %s242
      %p248 = scmp.eq.s32.totalorder %s36, 0
      %p249 = por %p247, %p248
      %p250 = scmp.ne.s32.totalorder %s239, %s242
      %p251 = scmp.eq.s32.totalorder %s41, 1
      %p252 = por %p250, %p251
      %p253 = scmp.ne.s32.totalorder %s242, %s243
      %p254 = scmp.eq.s32.totalorder %s41, 0
      %p255 = por %p253, %p254
      %p256 = scmp.ne.s32.totalorder %s242, %s243
      %p257 = scmp.eq.s32.totalorder %s42, 1
      %p258 = por %p256, %p257
      %p260 = scmp.ne.s32.totalorder %s243, %s259
      %p261 = scmp.eq.s32.totalorder %s42, 0
      %p262 = por %p260, %p261
      %s263 = ssub.s32 %s36, %s43
      %p264 = scmp.eq.s32.totalorder %s263, 0
      %s266 = sadd.s32 %s265, 1
      %s267 = scalar_select %p264, %s265, %s266
      %p270 = pneg %p264
      %p271 = scmp.eq.s32.totalorder %s36, 1
      %p272 = por %p270, %p271
      %p273 = scmp.ne.s32.totalorder %s265, %s268
      %p274 = scmp.eq.s32.totalorder %s36, 0
      %p275 = por %p273, %p274
      %p276 = scmp.ne.s32.totalorder %s265, %s268
      %p277 = scmp.eq.s32.totalorder %s41, 1
      %p278 = por %p276, %p277
      %p279 = scmp.ne.s32.totalorder %s268, %s269
      %p280 = scmp.eq.s32.totalorder %s41, 0
      %p281 = por %p279, %p280
      %p282 = scmp.ne.s32.totalorder %s268, %s269
      %p283 = scmp.eq.s32.totalorder %s42, 1
      %p284 = por %p282, %p283
      %p286 = scmp.ne.s32.totalorder %s269, %s285
      %p287 = scmp.eq.s32.totalorder %s42, 0
      %p288 = por %p286, %p287
      %s289 = ssub.s32 %s36, %s43
      %p290 = scmp.eq.s32.totalorder %s289, 0
      %s292 = sadd.s32 %s291, 1
      %s293 = scalar_select %p290, %s291, %s292
      %p296 = pneg %p290
      %p297 = scmp.eq.s32.totalorder %s36, 1
      %p298 = por %p296, %p297
      %p299 = scmp.ne.s32.totalorder %s291, %s294
      %p300 = scmp.eq.s32.totalorder %s36, 0
      %p301 = por %p299, %p300
      %p302 = scmp.ne.s32.totalorder %s291, %s294
      %p303 = scmp.eq.s32.totalorder %s41, 1
      %p304 = por %p302, %p303
      %p305 = scmp.ne.s32.totalorder %s294, %s295
      %p306 = scmp.eq.s32.totalorder %s41, 0
      %p307 = por %p305, %p306
      %p308 = scmp.ne.s32.totalorder %s294, %s295
      %p309 = scmp.eq.s32.totalorder %s42, 1
      %p310 = por %p308, %p309
      %p312 = scmp.ne.s32.totalorder %s295, %s311
      %p313 = scmp.eq.s32.totalorder %s42, 0
      %p314 = por %p312, %p313
      %s315 = ssub.s32 %s36, %s43
      %p316 = scmp.eq.s32.totalorder %s315, 0
      %s318 = sadd.s32 %s317, 1
      %s319 = scalar_select %p316, %s317, %s318
      %p322 = pneg %p316
      %p323 = scmp.eq.s32.totalorder %s36, 1
      %p324 = por %p322, %p323
      %p325 = scmp.ne.s32.totalorder %s317, %s320
      %p326 = scmp.eq.s32.totalorder %s36, 0
      %p327 = por %p325, %p326
      %p328 = scmp.ne.s32.totalorder %s317, %s320
      %p329 = scmp.eq.s32.totalorder %s41, 1
      %p330 = por %p328, %p329
      %p331 = scmp.ne.s32.totalorder %s320, %s321
      %p332 = scmp.eq.s32.totalorder %s41, 0
      %p333 = por %p331, %p332
      %p334 = scmp.ne.s32.totalorder %s320, %s321
      %p335 = scmp.eq.s32.totalorder %s42, 1
      %p336 = por %p334, %p335
      %p338 = scmp.ne.s32.totalorder %s321, %s337
      %p339 = scmp.eq.s32.totalorder %s42, 0
      %p340 = por %p338, %p339
      %s341 = ssub.s32 %s36, %s43
      %p342 = scmp.eq.s32.totalorder %s341, 0
      %s344 = sadd.s32 %s343, 1
      %s345 = scalar_select %p342, %s343, %s344
      %p348 = pneg %p342
      %p349 = scmp.eq.s32.totalorder %s36, 1
      %p350 = por %p348, %p349
      %p351 = scmp.ne.s32.totalorder %s343, %s346
      %p352 = scmp.eq.s32.totalorder %s36, 0
      %p353 = por %p351, %p352
      %p354 = scmp.ne.s32.totalorder %s343, %s346
      %p355 = scmp.eq.s32.totalorder %s41, 1
      %p356 = por %p354, %p355
      %p357 = scmp.ne.s32.totalorder %s346, %s347
      %p358 = scmp.eq.s32.totalorder %s41, 0
      %p359 = por %p357, %p358
      %p360 = scmp.ne.s32.totalorder %s346, %s347
      %p361 = scmp.eq.s32.totalorder %s42, 1
      %p362 = por %p360, %p361
      %p364 = scmp.ne.s32.totalorder %s347, %s363
      %p365 = scmp.eq.s32.totalorder %s42, 0
      %p366 = por %p364, %p365
      %s367 = ssub.s32 %s36, %s43
      %p368 = scmp.eq.s32.totalorder %s367, 0
      %s370 = sadd.s32 %s369, 1
      %s371 = scalar_select %p368, %s369, %s370
      %p374 = pneg %p368
      %p375 = scmp.eq.s32.totalorder %s36, 1
      %p376 = por %p374, %p375
      %p377 = scmp.ne.s32.totalorder %s369, %s372
      %p378 = scmp.eq.s32.totalorder %s36, 0
      %p379 = por %p377, %p378
      %p380 = scmp.ne.s32.totalorder %s369, %s372
      %p381 = scmp.eq.s32.totalorder %s41, 1
      %p382 = por %p380, %p381
      %p383 = scmp.ne.s32.totalorder %s372, %s373
      %p384 = scmp.eq.s32.totalorder %s41, 0
      %p385 = por %p383, %p384
      %p386 = scmp.ne.s32.totalorder %s372, %s373
      %p387 = scmp.eq.s32.totalorder %s42, 1
      %p388 = por %p386, %p387
      %p390 = scmp.ne.s32.totalorder %s373, %s389
      %p391 = scmp.eq.s32.totalorder %s42, 0
      %p392 = por %p390, %p391
      %s393 = ssub.s32 %s36, %s43
      %p394 = scmp.eq.s32.totalorder %s393, 0
      %s396 = sadd.s32 %s395, 1
      %s397 = scalar_select %p394, %s395, %s396
      %p400 = pneg %p394
      %p401 = scmp.eq.s32.totalorder %s36, 1
      %p402 = por %p400, %p401
      %p403 = scmp.ne.s32.totalorder %s395, %s398
      %p404 = scmp.eq.s32.totalorder %s36, 0
      %p405 = por %p403, %p404
      %p406 = scmp.ne.s32.totalorder %s395, %s398
      %p407 = scmp.eq.s32.totalorder %s41, 1
      %p408 = por %p406, %p407
      %p409 = scmp.ne.s32.totalorder %s398, %s399
      %p410 = scmp.eq.s32.totalorder %s41, 0
      %p411 = por %p409, %p410
      %p412 = scmp.ne.s32.totalorder %s398, %s399
      %p413 = scmp.eq.s32.totalorder %s42, 1
      %p414 = por %p412, %p413
      %p416 = scmp.ne.s32.totalorder %s399, %s415
      %p417 = scmp.eq.s32.totalorder %s42, 0
      %p418 = por %p416, %p417
      %s420 = sadd.s32 %s419, 1
      %p423 = scmp.eq.s32.totalorder %s36, 1
      %p424 = scmp.ne.s32.totalorder %s419, %s421
      %p425 = scmp.eq.s32.totalorder %s36, 0
      %p426 = por %p424, %p425
      %p427 = scmp.ne.s32.totalorder %s419, %s421
      %p428 = scmp.eq.s32.totalorder %s41, 1
      %p429 = por %p427, %p428
      %p430 = scmp.ne.s32.totalorder %s421, %s422
      %p431 = scmp.eq.s32.totalorder %s41, 0
      %p432 = por %p430, %p431
      %p433 = scmp.ne.s32.totalorder %s421, %s422
      %p434 = scmp.eq.s32.totalorder %s42, 1
      %p435 = por %p433, %p434
      %p437 = scmp.ne.s32.totalorder %s422, %s436
      %p438 = scmp.eq.s32.totalorder %s42, 0
      %p439 = por %p437, %p438
      %s441 = sadd.s32 %s440, 1
      %p444 = scmp.eq.s32.totalorder %s36, 1
      %p445 = scmp.ne.s32.totalorder %s440, %s442
      %p446 = scmp.eq.s32.totalorder %s36, 0
      %p447 = por %p445, %p446
      %p448 = scmp.ne.s32.totalorder %s440, %s442
      %p449 = scmp.eq.s32.totalorder %s41, 1
      %p450 = por %p448, %p449
      %p451 = scmp.ne.s32.totalorder %s442, %s443
      %p452 = scmp.eq.s32.totalorder %s41, 0
      %p453 = por %p451, %p452
      %p454 = scmp.ne.s32.totalorder %s442, %s443
      %p455 = scmp.eq.s32.totalorder %s42, 1
      %p456 = por %p454, %p455
      %p458 = scmp.ne.s32.totalorder %s443, %s457
      %p459 = scmp.eq.s32.totalorder %s42, 0
      %p460 = por %p458, %p459
      %s462 = sadd.s32 %s461, 1
      %p465 = scmp.eq.s32.totalorder %s36, 1
      %p466 = scmp.ne.s32.totalorder %s461, %s463
      %p467 = scmp.eq.s32.totalorder %s36, 0
      %p468 = por %p466, %p467
      %p469 = scmp.ne.s32.totalorder %s461, %s463
      %p470 = scmp.eq.s32.totalorder %s41, 1
      %p471 = por %p469, %p470
      %p472 = scmp.ne.s32.totalorder %s463, %s464
      %p473 = scmp.eq.s32.totalorder %s41, 0
      %p474 = por %p472, %p473
      %p475 = scmp.ne.s32.totalorder %s463, %s464
      %p476 = scmp.eq.s32.totalorder %s42, 1
      %p477 = por %p475, %p476
      %p479 = scmp.ne.s32.totalorder %s464, %s478
      %p480 = scmp.eq.s32.totalorder %s42, 0
      %p481 = por %p479, %p480
      %p482 = scmp.le.s32.totalorder 1, %s36
      %p483 = scmp.lt.s32.totalorder %s36, 3
      %p484 = pnand %p482, %p483
      %p485 = pneg %p484
      // Predicated region
      $region9: #{tpu_custom_call.1} parent=5 // pred_check
        _
      $region10: #{tpu_custom_call.1} parent=5 // pred_check_branch
        %487 = sbr.rel (%p484) target = $region12
      $region11: #{tpu_custom_call.1} parent=5 // pred_region
        %s488 = ssub.s32 %s36, 1
        // Predicated region
        $region13: #{tpu_custom_call.1} parent=11 // pred_check
          %p489 = pneg %p57
        $region14: #{tpu_custom_call.1} parent=11 // pred_check_branch
          %491 = sbr.rel (%p489) target = $region16
        $region15: #{tpu_custom_call.1} parent=11 // pred_region
          %493 = vsyncadd [#allocation4], 0
          %s495 = sshll.u32 %s0, 4
          %s496 = int_to_ptr.hbm [resolvable:$true] %s495
          %s497 = sshll.u32 [#allocation3], 4
          %s498 = int_to_ptr.vmem [resolvable:$true] %s497
          %500 = dma.hbm_to_vmem [thread:$0]  %s496, 128, %s498, [#allocation4]
        $region16: #{tpu_custom_call.1} parent=11 // pred_fallthru
          _
        // Predicated region
        $region17: #{tpu_custom_call.1} parent=11 // pred_check
          %p501 = pneg %p78
        $region18: #{tpu_custom_call.1} parent=11 // pred_check_branch
          %503 = sbr.rel (%p501) target = $region20
        $region19: #{tpu_custom_call.1} parent=11 // pred_region
          %505 = vsyncadd [#allocation7], 0
          %s506 = sshll.u32 %s1, 4
          %s507 = int_to_ptr.hbm [resolvable:$true] %s506
          %s508 = sshll.u32 [#allocation6], 4
          %s509 = int_to_ptr.vmem [resolvable:$true] %s508
          %514 = dma.hbm_to_vmem [thread:$0]  %s507, 128, %s509, [#allocation7], 64, 64, 4
        $region20: #{tpu_custom_call.1} parent=11 // pred_fallthru
          _
        // Predicated region
        $region21: #{tpu_custom_call.1} parent=11 // pred_check
          %p515 = pneg %p99
        $region22: #{tpu_custom_call.1} parent=11 // pred_check_branch
          %517 = sbr.rel (%p515) target = $region24
        $region23: #{tpu_custom_call.1} parent=11 // pred_region
          %519 = vsyncadd [#allocation7], 0
          %s521 = sshll.u32 %s2, 4
          %s522 = int_to_ptr.hbm [resolvable:$true] %s521
          %s523 = sshll.u32 [#allocation8], 4
          %s524 = int_to_ptr.vmem [resolvable:$true] %s523
          %526 = dma.hbm_to_vmem [thread:$0]  %s522, 16, %s524, [#allocation7]
        $region24: #{tpu_custom_call.1} parent=11 // pred_fallthru
          _
        // Predicated region
        $region25: #{tpu_custom_call.1} parent=11 // pred_check
          %p527 = pneg %p432
        $region26: #{tpu_custom_call.1} parent=11 // pred_check_branch
          %529 = sbr.rel (%p527) target = $region28
        $region27: #{tpu_custom_call.1} parent=11 // pred_region
          %531 = vsyncadd [#allocation19], 0
          %s532 = sshll.u32 %s15, 4
          %s533 = int_to_ptr.hbm [resolvable:$true] %s532
          %s534 = sshll.u32 [#allocation18], 4
          %s535 = int_to_ptr.vmem [resolvable:$true] %s534
          %540 = dma.hbm_to_vmem [thread:$0]  %s533, 256, %s535, [#allocation19], 64, 64, 4
        $region28: #{tpu_custom_call.1} parent=11 // pred_fallthru
          _
        // Predicated region
        $region29: #{tpu_custom_call.1} parent=11 // pred_check
          %p541 = pneg %p453
        $region30: #{tpu_custom_call.1} parent=11 // pred_check_branch
          %543 = sbr.rel (%p541) target = $region32
        $region31: #{tpu_custom_call.1} parent=11 // pred_region
          _
        $region32: #{tpu_custom_call.1} parent=11 // pred_fallthru
          _
      $region12: #{tpu_custom_call.1} parent=5 // pred_fallthru
        _
      %p544 = scmp.lt.s32.totalorder %s36, 2
      // Predicated region
      $region33: #{tpu_custom_call.1} parent=5 // pred_check
        %p545 = pneg %p544
      $region34: #{tpu_custom_call.1} parent=5 // pred_check_branch
        %547 = sbr.rel (%p545) target = $region36
      $region35: #{tpu_custom_call.1} parent=5 // pred_region
        // Predicated region
        $region37: #{tpu_custom_call.1} parent=35 // pred_check
          %p548 = pneg %p119
        $region38: #{tpu_custom_call.1} parent=35 // pred_check_branch
          %550 = sbr.rel (%p548) target = $region40
        $region39: #{tpu_custom_call.1} parent=35 // pred_region
          %s551 = sand.u32 %s36, 1
          %s552 = scalar_lea.sflag [#allocation10], %s551
          %s553 = sand.u32 %s109, 1
          %s554 = smul.addr %s553, 16
          %s555 = scalar_lea.vmem [#allocation9], %s554
          %557 = vsyncadd %s552, 0
          %s558 = smul.addr %s36, 4
          %s559 = smul.addr %s558, 4
          %s560 = scalar_lea.hbm %s3, %s559
          %s561 = sshll.u32 %s560, 4
          %s562 = int_to_ptr.hbm [resolvable:$true] %s561
          %s563 = sshll.u32 %s555, 4
          %s564 = int_to_ptr.vmem [resolvable:$true] %s563
          %569 = dma.hbm_to_vmem [thread:$0]  %s562, 256, %s564, %s552, 64, 64, 4
        $region40: #{tpu_custom_call.1} parent=35 // pred_fallthru
          _
        // Predicated region
        $region41: #{tpu_custom_call.1} parent=35 // pred_check
          %p570 = pneg %p145
        $region42: #{tpu_custom_call.1} parent=35 // pred_check_branch
          %572 = sbr.rel (%p570) target = $region44
        $region43: #{tpu_custom_call.1} parent=35 // pred_region
          %p573 = scmp.lt.s32.totalorder %s36, 1
          %s574 = scalar_select %p573, %s36, 1
          %s575 = scalar_lea.vmem %s4, %s574
        $region44: #{tpu_custom_call.1} parent=35 // pred_fallthru
          _
        // Predicated region
        $region45: #{tpu_custom_call.1} parent=35 // pred_check
          %p576 = pneg %p171
        $region46: #{tpu_custom_call.1} parent=35 // pred_check_branch
          %578 = sbr.rel (%p576) target = $region48
        $region47: #{tpu_custom_call.1} parent=35 // pred_region
          %s579 = sand.u32 %s36, 1
          %s580 = scalar_lea.sflag [#allocation10], %s579
          %s581 = sand.u32 %s161, 1
          %s582 = smul.addr %s581, 16
          %s583 = scalar_lea.vmem [#allocation11], %s582
          %585 = vsyncadd %s580, 0
          %s586 = smul.addr %s36, 4
          %s587 = smul.addr %s586, 4
          %s588 = scalar_lea.hbm %s5, %s587
          %s589 = sshll.u32 %s588, 4
          %s590 = int_to_ptr.hbm [resolvable:$true] %s589
          %s591 = sshll.u32 %s583, 4
          %s592 = int_to_ptr.vmem [resolvable:$true] %s591
          %597 = dma.hbm_to_vmem [thread:$0]  %s590, 256, %s592, %s580, 64, 64, 4
        $region48: #{tpu_custom_call.1} parent=35 // pred_fallthru
          _
        // Predicated region
        $region49: #{tpu_custom_call.1} parent=35 // pred_check
          %p598 = pneg %p197
        $region50: #{tpu_custom_call.1} parent=35 // pred_check_branch
          %600 = sbr.rel (%p598) target = $region52
        $region51: #{tpu_custom_call.1} parent=35 // pred_region
          %p601 = scmp.lt.s32.totalorder %s36, 1
          %s602 = scalar_select %p601, %s36, 1
          %s603 = scalar_lea.vmem %s6, %s602
        $region52: #{tpu_custom_call.1} parent=35 // pred_fallthru
          _
        // Predicated region
        $region53: #{tpu_custom_call.1} parent=35 // pred_check
          %p604 = pneg %p223
        $region54: #{tpu_custom_call.1} parent=35 // pred_check_branch
          %606 = sbr.rel (%p604) target = $region56
        $region55: #{tpu_custom_call.1} parent=35 // pred_region
          %s607 = sand.u32 %s36, 1
          %s608 = scalar_lea.sflag [#allocation13], %s607
          %s609 = sand.u32 %s213, 1
          %s610 = smul.addr %s609, 16
          %s611 = scalar_lea.vmem [#allocation12], %s610
          %613 = vsyncadd %s608, 0
          %s614 = smul.addr %s36, 4
          %s615 = smul.addr %s614, 4
          %s616 = scalar_lea.hbm %s7, %s615
          %s617 = sshll.u32 %s616, 4
          %s618 = int_to_ptr.hbm [resolvable:$true] %s617
          %s619 = sshll.u32 %s611, 4
          %s620 = int_to_ptr.vmem [resolvable:$true] %s619
          %625 = dma.hbm_to_vmem [thread:$0]  %s618, 256, %s620, %s608, 64, 64, 4
        $region56: #{tpu_custom_call.1} parent=35 // pred_fallthru
          _
        // Predicated region
        $region57: #{tpu_custom_call.1} parent=35 // pred_check
          %p626 = pneg %p249
        $region58: #{tpu_custom_call.1} parent=35 // pred_check_branch
          %628 = sbr.rel (%p626) target = $region60
        $region59: #{tpu_custom_call.1} parent=35 // pred_region
          %p629 = scmp.lt.s32.totalorder %s36, 1
          %s630 = scalar_select %p629, %s36, 1
          %s631 = scalar_lea.vmem %s8, %s630
        $region60: #{tpu_custom_call.1} parent=35 // pred_fallthru
          _
        // Predicated region
        $region61: #{tpu_custom_call.1} parent=35 // pred_check
          %p632 = pneg %p275
        $region62: #{tpu_custom_call.1} parent=35 // pred_check_branch
          %634 = sbr.rel (%p632) target = $region64
        $region63: #{tpu_custom_call.1} parent=35 // pred_region
          %s635 = sand.u32 %s36, 1
          %s636 = scalar_lea.sflag [#allocation13], %s635
          %s637 = sand.u32 %s265, 1
          %s638 = smul.addr %s637, 16
          %s639 = scalar_lea.vmem [#allocation14], %s638
          %641 = vsyncadd %s636, 0
          %s642 = smul.addr %s36, 4
          %s643 = smul.addr %s642, 4
          %s644 = scalar_lea.hbm %s9, %s643
          %s645 = sshll.u32 %s644, 4
          %s646 = int_to_ptr.hbm [resolvable:$true] %s645
          %s647 = sshll.u32 %s639, 4
          %s648 = int_to_ptr.vmem [resolvable:$true] %s647
          %653 = dma.hbm_to_vmem [thread:$0]  %s646, 256, %s648, %s636, 64, 64, 4
        $region64: #{tpu_custom_call.1} parent=35 // pred_fallthru
          _
        // Predicated region
        $region65: #{tpu_custom_call.1} parent=35 // pred_check
          %p654 = pneg %p301
        $region66: #{tpu_custom_call.1} parent=35 // pred_check_branch
          %656 = sbr.rel (%p654) target = $region68
        $region67: #{tpu_custom_call.1} parent=35 // pred_region
          %p657 = scmp.lt.s32.totalorder %s36, 1
          %s658 = scalar_select %p657, %s36, 1
          %s659 = scalar_lea.vmem %s10, %s658
        $region68: #{tpu_custom_call.1} parent=35 // pred_fallthru
          _
        // Predicated region
        $region69: #{tpu_custom_call.1} parent=35 // pred_check
          %p660 = pneg %p327
        $region70: #{tpu_custom_call.1} parent=35 // pred_check_branch
          %662 = sbr.rel (%p660) target = $region72
        $region71: #{tpu_custom_call.1} parent=35 // pred_region
          %p663 = scmp.lt.s32.totalorder %s36, 1
          %s664 = scalar_select %p663, %s36, 1
          %s665 = scalar_lea.vmem %s11, %s664
        $region72: #{tpu_custom_call.1} parent=35 // pred_fallthru
          _
        // Predicated region
        $region73: #{tpu_custom_call.1} parent=35 // pred_check
          %p666 = pneg %p353
        $region74: #{tpu_custom_call.1} parent=35 // pred_check_branch
          %668 = sbr.rel (%p666) target = $region76
        $region75: #{tpu_custom_call.1} parent=35 // pred_region
          %s669 = sand.u32 %s36, 1
          %s670 = scalar_lea.sflag [#allocation16], %s669
          %s671 = sand.u32 %s343, 1
          %s672 = scalar_lea.vmem [#allocation15], %s671
          %674 = vsyncadd %s670, 0
          %s675 = scalar_lea.hbm %s12, %s36
          %s677 = sshll.u32 %s675, 4
          %s678 = int_to_ptr.hbm [resolvable:$true] %s677
          %s679 = sshll.u32 %s672, 4
          %s680 = int_to_ptr.vmem [resolvable:$true] %s679
          %682 = dma.hbm_to_vmem [thread:$0]  %s678, 16, %s680, %s670
        $region76: #{tpu_custom_call.1} parent=35 // pred_fallthru
          _
        // Predicated region
        $region77: #{tpu_custom_call.1} parent=35 // pred_check
          %p683 = pneg %p379
        $region78: #{tpu_custom_call.1} parent=35 // pred_check_branch
          %685 = sbr.rel (%p683) target = $region80
        $region79: #{tpu_custom_call.1} parent=35 // pred_region
          %p686 = scmp.lt.s32.totalorder %s36, 1
          %s687 = scalar_select %p686, %s36, 1
          %s688 = scalar_lea.vmem %s13, %s687
        $region80: #{tpu_custom_call.1} parent=35 // pred_fallthru
          _
        // Predicated region
        $region81: #{tpu_custom_call.1} parent=35 // pred_check
          %p689 = pneg %p405
        $region82: #{tpu_custom_call.1} parent=35 // pred_check_branch
          %691 = sbr.rel (%p689) target = $region84
        $region83: #{tpu_custom_call.1} parent=35 // pred_region
          %s692 = sand.u32 %s36, 1
          %s693 = scalar_lea.sflag [#allocation16], %s692
          %s694 = sand.u32 %s395, 1
          %s695 = scalar_lea.vmem [#allocation17], %s694
          %697 = vsyncadd %s693, 0
          %s698 = scalar_lea.hbm %s14, %s36
          %s700 = sshll.u32 %s698, 4
          %s701 = int_to_ptr.hbm [resolvable:$true] %s700
          %s702 = sshll.u32 %s695, 4
          %s703 = int_to_ptr.vmem [resolvable:$true] %s702
          %705 = dma.hbm_to_vmem [thread:$0]  %s701, 16, %s703, %s693
        $region84: #{tpu_custom_call.1} parent=35 // pred_fallthru
          _
      $region36: #{tpu_custom_call.1} parent=5 // pred_fallthru
        _
      %p706 = scmp.le.s32.totalorder 1, %s36
      %p707 = scmp.lt.s32.totalorder %s36, 3
      %p708 = pnand %p706, %p707
      %p709 = pneg %p708
      // Predicated region
      $region85: #{tpu_custom_call.1} parent=5 // pred_check
        _
      $region86: #{tpu_custom_call.1} parent=5 // pred_check_branch
        %711 = sbr.rel (%p708) target = $region88
      $region87: #{tpu_custom_call.1} parent=5 // pred_region
        %s712 = ssub.s32 %s36, 1
        // Predicated region
        $region89: #{tpu_custom_call.1} parent=87 // pred_check
          %p713 = pneg %p57
        $region90: #{tpu_custom_call.1} parent=87 // pred_check_branch
          %715 = sbr.rel (%p713) target = $region92
        $region91: #{tpu_custom_call.1} parent=87 // pred_region
          %717 = dma.done [#allocation4], 128
        $region92: #{tpu_custom_call.1} parent=87 // pred_fallthru
          _
        // Predicated region
        $region93: #{tpu_custom_call.1} parent=87 // pred_check
          %p718 = pneg %p78
        $region94: #{tpu_custom_call.1} parent=87 // pred_check_branch
          %720 = sbr.rel (%p718) target = $region96
        $region95: #{tpu_custom_call.1} parent=87 // pred_region
          %722 = dma.done [#allocation7], 128
        $region96: #{tpu_custom_call.1} parent=87 // pred_fallthru
          _
        // Predicated region
        $region97: #{tpu_custom_call.1} parent=87 // pred_check
          %p723 = pneg %p99
        $region98: #{tpu_custom_call.1} parent=87 // pred_check_branch
          %725 = sbr.rel (%p723) target = $region100
        $region99: #{tpu_custom_call.1} parent=87 // pred_region
          %727 = dma.done [#allocation7], 16
        $region100: #{tpu_custom_call.1} parent=87 // pred_fallthru
          _
        %s728 = sand.u32 %s41, 1
        %s729 = scalar_lea.sflag [#allocation10], %s728
        %s730 = sand.u32 %s112, 1
        %s731 = smul.addr %s730, 16
        %s732 = scalar_lea.vmem [#allocation9], %s731
        // Predicated region
        $region101: #{tpu_custom_call.1} parent=87 // pred_check
          %p733 = pneg %p125
        $region102: #{tpu_custom_call.1} parent=87 // pred_check_branch
          %735 = sbr.rel (%p733) target = $region104
        $region103: #{tpu_custom_call.1} parent=87 // pred_region
          %737 = dma.done %s729, 256
        $region104: #{tpu_custom_call.1} parent=87 // pred_fallthru
          _
        %s738 = sand.u32 %s41, 1
        %s739 = scalar_lea.sflag [#allocation10], %s738
        %s740 = sand.u32 %s164, 1
        %s741 = smul.addr %s740, 16
        %s742 = scalar_lea.vmem [#allocation11], %s741
        // Predicated region
        $region105: #{tpu_custom_call.1} parent=87 // pred_check
          %p743 = pneg %p177
        $region106: #{tpu_custom_call.1} parent=87 // pred_check_branch
          %745 = sbr.rel (%p743) target = $region108
        $region107: #{tpu_custom_call.1} parent=87 // pred_region
          %747 = dma.done %s739, 256
        $region108: #{tpu_custom_call.1} parent=87 // pred_fallthru
          _
        %s748 = sand.u32 %s41, 1
        %s749 = scalar_lea.sflag [#allocation13], %s748
        %s750 = sand.u32 %s216, 1
        %s751 = smul.addr %s750, 16
        %s752 = scalar_lea.vmem [#allocation12], %s751
        // Predicated region
        $region109: #{tpu_custom_call.1} parent=87 // pred_check
          %p753 = pneg %p229
        $region110: #{tpu_custom_call.1} parent=87 // pred_check_branch
          %755 = sbr.rel (%p753) target = $region112
        $region111: #{tpu_custom_call.1} parent=87 // pred_region
          %757 = dma.done %s749, 256
        $region112: #{tpu_custom_call.1} parent=87 // pred_fallthru
          _
        %s758 = sand.u32 %s41, 1
        %s759 = scalar_lea.sflag [#allocation13], %s758
        %s760 = sand.u32 %s268, 1
        %s761 = smul.addr %s760, 16
        %s762 = scalar_lea.vmem [#allocation14], %s761
        // Predicated region
        $region113: #{tpu_custom_call.1} parent=87 // pred_check
          %p763 = pneg %p281
        $region114: #{tpu_custom_call.1} parent=87 // pred_check_branch
          %765 = sbr.rel (%p763) target = $region116
        $region115: #{tpu_custom_call.1} parent=87 // pred_region
          %767 = dma.done %s759, 256
        $region116: #{tpu_custom_call.1} parent=87 // pred_fallthru
          _
        %s768 = sand.u32 %s41, 1
        %s769 = scalar_lea.sflag [#allocation16], %s768
        %s770 = sand.u32 %s346, 1
        %s771 = scalar_lea.vmem [#allocation15], %s770
        // Predicated region
        $region117: #{tpu_custom_call.1} parent=87 // pred_check
          %p772 = pneg %p359
        $region118: #{tpu_custom_call.1} parent=87 // pred_check_branch
          %774 = sbr.rel (%p772) target = $region120
        $region119: #{tpu_custom_call.1} parent=87 // pred_region
          %776 = dma.done %s769, 16
        $region120: #{tpu_custom_call.1} parent=87 // pred_fallthru
          _
        %s777 = sand.u32 %s41, 1
        %s778 = scalar_lea.sflag [#allocation16], %s777
        %s779 = sand.u32 %s398, 1
        %s780 = scalar_lea.vmem [#allocation17], %s779
        // Predicated region
        $region121: #{tpu_custom_call.1} parent=87 // pred_check
          %p781 = pneg %p411
        $region122: #{tpu_custom_call.1} parent=87 // pred_check_branch
          %783 = sbr.rel (%p781) target = $region124
        $region123: #{tpu_custom_call.1} parent=87 // pred_region
          %785 = dma.done %s778, 16
        $region124: #{tpu_custom_call.1} parent=87 // pred_fallthru
          _
        // Predicated region
        $region125: #{tpu_custom_call.1} parent=87 // pred_check
          %p786 = pneg %p432
        $region126: #{tpu_custom_call.1} parent=87 // pred_check_branch
          %788 = sbr.rel (%p786) target = $region128
        $region127: #{tpu_custom_call.1} parent=87 // pred_region
          %790 = dma.done [#allocation19], 256
        $region128: #{tpu_custom_call.1} parent=87 // pred_fallthru
          _
        %p791 = pneg %p57
        %p792 = pneg %p54
        %p793 = pneg %p78
        %p794 = pneg %p75
        %p795 = pneg %p99
        %p796 = pneg %p96
        %s797 = sand.u32 %s41, 1
        %s798 = scalar_lea.sflag [#allocation10], %s797
        %s799 = sand.u32 %s112, 1
        %s800 = smul.addr %s799, 16
        %s801 = scalar_lea.vmem [#allocation9], %s800
        %p802 = pneg %p125
        %p803 = pneg %p122
        %p804 = scmp.lt.s32.totalorder %s41, 1
        %s805 = scalar_select %p804, %s41, 1
        %s806 = scalar_lea.vmem %s4, %s805
        %p807 = pneg %p151
        %p808 = pneg %p148
        %s809 = sand.u32 %s41, 1
        %s810 = scalar_lea.sflag [#allocation10], %s809
        %s811 = sand.u32 %s164, 1
        %s812 = smul.addr %s811, 16
        %s813 = scalar_lea.vmem [#allocation11], %s812
        %p814 = pneg %p177
        %p815 = pneg %p174
        %p816 = scmp.lt.s32.totalorder %s41, 1
        %s817 = scalar_select %p816, %s41, 1
        %s818 = scalar_lea.vmem %s6, %s817
        %p819 = pneg %p203
        %p820 = pneg %p200
        %s821 = sand.u32 %s41, 1
        %s822 = scalar_lea.sflag [#allocation13], %s821
        %s823 = sand.u32 %s216, 1
        %s824 = smul.addr %s823, 16
        %s825 = scalar_lea.vmem [#allocation12], %s824
        %p826 = pneg %p229
        %p827 = pneg %p226
        %p828 = scmp.lt.s32.totalorder %s41, 1
        %s829 = scalar_select %p828, %s41, 1
        %s830 = scalar_lea.vmem %s8, %s829
        %p831 = pneg %p255
        %p832 = pneg %p252
        %s833 = sand.u32 %s41, 1
        %s834 = scalar_lea.sflag [#allocation13], %s833
        %s835 = sand.u32 %s268, 1
        %s836 = smul.addr %s835, 16
        %s837 = scalar_lea.vmem [#allocation14], %s836
        %p838 = pneg %p281
        %p839 = pneg %p278
        %p840 = scmp.lt.s32.totalorder %s41, 1
        %s841 = scalar_select %p840, %s41, 1
        %s842 = scalar_lea.vmem %s10, %s841
        %p843 = pneg %p307
        %p844 = pneg %p304
        %p845 = scmp.lt.s32.totalorder %s41, 1
        %s846 = scalar_select %p845, %s41, 1
        %s847 = scalar_lea.vmem %s11, %s846
        %p848 = pneg %p333
        %p849 = pneg %p330
        %s850 = sand.u32 %s41, 1
        %s851 = scalar_lea.sflag [#allocation16], %s850
        %s852 = sand.u32 %s346, 1
        %s853 = scalar_lea.vmem [#allocation15], %s852
        %p854 = pneg %p359
        %p855 = pneg %p356
        %p856 = scmp.lt.s32.totalorder %s41, 1
        %s857 = scalar_select %p856, %s41, 1
        %s858 = scalar_lea.vmem %s13, %s857
        %p859 = pneg %p385
        %p860 = pneg %p382
        %s861 = sand.u32 %s41, 1
        %s862 = scalar_lea.sflag [#allocation16], %s861
        %s863 = sand.u32 %s398, 1
        %s864 = scalar_lea.vmem [#allocation17], %s863
        %p865 = pneg %p411
        %p866 = pneg %p408
        %p867 = pneg %p432
        %p868 = pneg %p429
        %p869 = pneg %p453
        %p870 = pneg %p450
        %p871 = pneg %p474
        %p872 = pneg %p471
        %p873 = scmp.lt.s32.totalorder %s41, 1
        %s874 = scalar_select %p873, %s41, 1
        %s875 = scalar_lea.vmem %s4, %s874
        %p876 = scmp.lt.s32.totalorder %s41, 1
        %s877 = scalar_select %p876, %s41, 1
        %s878 = scalar_lea.vmem %s6, %s877
        %p879 = scmp.lt.s32.totalorder %s41, 1
        %s880 = scalar_select %p879, %s41, 1
        %s881 = scalar_lea.vmem %s8, %s880
        %p882 = scmp.lt.s32.totalorder %s41, 1
        %s883 = scalar_select %p882, %s41, 1
        %s884 = scalar_lea.vmem %s10, %s883
        %p885 = scmp.lt.s32.totalorder %s41, 1
        %s886 = scalar_select %p885, %s41, 1
        %s887 = scalar_lea.vmem %s11, %s886
        %p888 = scmp.lt.s32.totalorder %s41, 1
        %s889 = scalar_select %p888, %s41, 1
        %s890 = scalar_lea.vmem %s13, %s889
        %p892 = scmp.eq.s32.totalorder %s41, 0
        // Predicated region
        $region129: #{tpu_custom_call.1} parent=87 // pred_check
          %p893 = pneg %p892
        $region130: #{tpu_custom_call.1} parent=87 // pred_check_branch
          %895 = sbr.rel (%p893) target = $region132
        $region131: #{tpu_custom_call.1} parent=87 // pred_region
          %v896 = vld [vmem:[#allocation3] sm:$0xff]
          %v897 = vpack.c.bf16 %v896, %v896
          %v898 = vld [vmem:[#allocation6] sm:$0xf]
          %v899 = vld [vmem:[#allocation6 + $0x4] sm:$0xf]
          %v900 = vld [vmem:[#allocation8] sm:$0x1]
          %v902 = vperm.slane %v900, 0
          %v906 = vunpack.c.l.b16 %v898
          %v907 = vunpack.c.l.b16 %v899
          %v908 = vpack.c.b16 %v907, %v906
          %vm910 = vcmask 130048
          %v912 = vsel %vm910, %v897, 0
          %914 = vmatpush.bf16.msra.mxu0 0
          %915 = vmatpush.bf16.msra.mxu0 0
          %916 = vmatpush.bf16.msra.mxu0 0
          %917 = vmatpush.bf16.msra.mxu0 0
          %918 = vmatpush.bf16.msra.mxu0 0
          %919 = vmatpush.bf16.msra.mxu0 0
          %920 = vmatpush.bf16.msra.mxu0 0
          %921 = vmatpush.bf16.msra.mxu0 %v908
          %922 = vmatmul.bf16.gmra.mxu0 %v912
          %v923 = vpop.f32.mrf.mxu0
          %v924 = vadd.f32 %v902, %v923
          %v925 = vpop.f32.mrf.mxu0
          %926 = vdwg.mxu0
          %vm927 = vcmask 261120
          %928 = vst.msk [vmem:[#allocation2] sm:$0xff] %vm927, %v924
        $region132: #{tpu_custom_call.1} parent=87 // pred_fallthru
          _
        %v929 = vld [vmem:[#allocation2] sm:$0xff]
        %v930 = vpack.c.bf16 %v929, %v929
        %v931 = vld [vmem:[%s732] sm:$0xf]
        %v932 = vld [vmem:[%s732 + $0x4] sm:$0xf]
        %v933 = vld [vmem:[%s732 + $0x8] sm:$0xf]
        %v934 = vld [vmem:[%s732 + $0xc] sm:$0xf]
        %v935 = vld [vmem:[%s875] sm:$0x1]
        %v937 = vperm.slane %v935, 0
        %v943 = vunpack.c.l.b16 %v931
        %v944 = vunpack.c.l.b16 %v932
        %v945 = vunpack.c.l.b16 %v933
        %v946 = vunpack.c.l.b16 %v934
        %v947 = vpack.c.b16 %v944, %v943
        %v948 = vpack.c.b16 %v946, %v945
        %vm951 = vcmask 261120
        %v953 = vsel %vm951, %v930, 0
        %955 = vmatpush.bf16.msra.mxu0 0
        %956 = vmatpush.bf16.msra.mxu0 0
        %957 = vmatpush.bf16.msra.mxu0 0
        %958 = vmatpush.bf16.msra.mxu0 0
        %959 = vmatpush.bf16.msra.mxu0 0
        %960 = vmatpush.bf16.msra.mxu0 0
        %961 = vmatpush.bf16.msra.mxu0 %v948
        %962 = vmatpush.bf16.msra.mxu0 %v947
        %963 = vmatmul.bf16.gmra.mxu0 %v953
        %v964 = vpop.f32.mrf.mxu0
        %v965 = vadd.f32 %v937, %v964
        %v966 = vpop.f32.mrf.mxu0
        %967 = vdwg.mxu0
        %969 = vrot.lane.b32.xlu0 %v965, 120
        %v970 = vpop.permute.xlu0 %969
        %972 = vrot.lane.b32.xlu0 %v965, 112
        %v973 = vpop.permute.xlu0 %972
        %975 = vrot.lane.b32.xlu0 %v965, 104
        %v976 = vpop.permute.xlu0 %975
        %v978 = vmul.f32 %v965, 0.35355338
        %v979 = vmul.f32 %v970, 0.35355338
        %v980 = vmul.f32 %v973, 0.35355338
        %v981 = vmul.f32 %v976, 0.35355338
        %v982 = vpack.c.bf16 %v978, %v978
        %v983 = vpack.c.bf16 %v979, %v979
        %v984 = vpack.c.bf16 %v980, %v980
        %v985 = vpack.c.bf16 %v981, %v981
        %v986 = vpack.c.bf16 %v965, %v965
        %v987 = vpack.c.bf16 %v970, %v970
        %v988 = vpack.c.bf16 %v973, %v973
        %v989 = vpack.c.bf16 %v976, %v976
        %v991 = vunpack.c.l.b16 %v986
        %v992 = vpack.c.b16 %v991, %v991
        %993 = vrot.lane.b32.xlu0 %v992, 96
        %v994 = vpop.permute.xlu0 %993
        %vm995 = vcmask 64512
        %v997 = vsel %vm995, %v982, 0
        %v1000 = vsel %vm995, %v994, 0
        %1002 = vmatpush.bf16.xpose.msra.mxu0 0
        %1003 = vmatpush.bf16.xpose.msra.mxu0 0
        %1004 = vmatpush.bf16.xpose.msra.mxu0 0
        %1005 = vmatpush.bf16.xpose.msra.mxu0 0
        %1006 = vmatpush.bf16.xpose.msra.mxu0 0
        %1007 = vmatpush.bf16.xpose.msra.mxu0 0
        %1008 = vmatpush.bf16.xpose.msra.mxu0 0
        %1009 = vmatpush.bf16.xpose.msra.mxu0 %v1000
        %1010 = vmatmul.bf16.gmra.mxu0 %v997
        %v1011 = vpop.f32.mrf.mxu0
        %v1012 = vadd.f32 0.0, %v1011
        %v1013 = vpop.f32.mrf.mxu0
        %1014 = vdwg.mxu0
        %v1016 = vunpack.c.l.b16 %v987
        %v1017 = vpack.c.b16 %v1016, %v1016
        %1018 = vrot.lane.b32.xlu0 %v1017, 96
        %v1019 = vpop.permute.xlu0 %1018
        %v1021 = vsel %vm995, %v983, 0
        %v1024 = vsel %vm995, %v1019, 0
        %1026 = vmatpush.bf16.xpose.msra.mxu0 0
        %1027 = vmatpush.bf16.xpose.msra.mxu0 0
        %1028 = vmatpush.bf16.xpose.msra.mxu0 0
        %1029 = vmatpush.bf16.xpose.msra.mxu0 0
        %1030 = vmatpush.bf16.xpose.msra.mxu0 0
        %1031 = vmatpush.bf16.xpose.msra.mxu0 0
        %1032 = vmatpush.bf16.xpose.msra.mxu0 0
        %1033 = vmatpush.bf16.xpose.msra.mxu0 %v1024
        %1034 = vmatmul.bf16.gmra.mxu0 %v1021
        %v1035 = vpop.f32.mrf.mxu0
        %v1036 = vadd.f32 0.0, %v1035
        %v1037 = vpop.f32.mrf.mxu0
        %1038 = vdwg.mxu0
        %v1040 = vunpack.c.l.b16 %v988
        %v1041 = vpack.c.b16 %v1040, %v1040
        %1042 = vrot.lane.b32.xlu0 %v1041, 96
        %v1043 = vpop.permute.xlu0 %1042
        %v1045 = vsel %vm995, %v984, 0
        %v1048 = vsel %vm995, %v1043, 0
        %1050 = vmatpush.bf16.xpose.msra.mxu0 0
        %1051 = vmatpush.bf16.xpose.msra.mxu0 0
        %1052 = vmatpush.bf16.xpose.msra.mxu0 0
        %1053 = vmatpush.bf16.xpose.msra.mxu0 0
        %1054 = vmatpush.bf16.xpose.msra.mxu0 0
        %1055 = vmatpush.bf16.xpose.msra.mxu0 0
        %1056 = vmatpush.bf16.xpose.msra.mxu0 0
        %1057 = vmatpush.bf16.xpose.msra.mxu0 %v1048
        %1058 = vmatmul.bf16.gmra.mxu0 %v1045
        %v1059 = vpop.f32.mrf.mxu0
        %v1060 = vadd.f32 0.0, %v1059
        %v1061 = vpop.f32.mrf.mxu0
        %1062 = vdwg.mxu0
        %v1064 = vunpack.c.l.b16 %v989
        %v1065 = vpack.c.b16 %v1064, %v1064
        %1066 = vrot.lane.b32.xlu0 %v1065, 96
        %v1067 = vpop.permute.xlu0 %1066
        %v1069 = vsel %vm995, %v985, 0
        %v1072 = vsel %vm995, %v1067, 0
        %1074 = vmatpush.bf16.xpose.msra.mxu0 0
        %1075 = vmatpush.bf16.xpose.msra.mxu0 0
        %1076 = vmatpush.bf16.xpose.msra.mxu0 0
        %1077 = vmatpush.bf16.xpose.msra.mxu0 0
        %1078 = vmatpush.bf16.xpose.msra.mxu0 0
        %1079 = vmatpush.bf16.xpose.msra.mxu0 0
        %1080 = vmatpush.bf16.xpose.msra.mxu0 0
        %1081 = vmatpush.bf16.xpose.msra.mxu0 %v1072
        %1082 = vmatmul.bf16.gmra.mxu0 %v1069
        %v1083 = vpop.f32.mrf.mxu0
        %v1084 = vadd.f32 0.0, %v1083
        %v1085 = vpop.f32.mrf.mxu0
        %1086 = vdwg.mxu0
        %v1087 = vsel %vm995, %v1012, -inf
        %1088 = vmax.xlane.f32.xlu0 %v1087
        %v1089 = vpop.xlane.xlu0 %1088
        %v1090 = vsel %vm995, %v1036, -inf
        %1091 = vmax.xlane.f32.xlu0 %v1090
        %v1092 = vpop.xlane.xlu0 %1091
        %v1093 = vsel %vm995, %v1060, -inf
        %1094 = vmax.xlane.f32.xlu0 %v1093
        %v1095 = vpop.xlane.xlu0 %1094
        %v1096 = vsel %vm995, %v1084, -inf
        %1097 = vmax.xlane.f32.xlu0 %v1096
        %v1098 = vpop.xlane.xlu0 %1097
        %v1099 = vsub.f32 %v1012, %v1089
        %v1100 = vsub.f32 %v1036, %v1092
        %v1101 = vsub.f32 %v1060, %v1095
        %v1102 = vsub.f32 %v1084, %v1098
        %v1103 = vmul.f32 %v1099, 1.442695
        %v1104 = vpow.pop %v1103
        %v1105 = vmul.f32 %v1100, 1.442695
        %v1106 = vpow.pop %v1105
        %v1107 = vmul.f32 %v1101, 1.442695
        %v1108 = vpow.pop %v1107
        %v1109 = vmul.f32 %v1102, 1.442695
        %v1110 = vpow.pop %v1109
        %v1111 = vsel %vm995, %v1104, 0.0
        %1112 = vadd.xlane.f32.xlu0 %v1111
        %v1113 = vpop.xlane.xlu0 %1112
        %v1114 = vsel %vm995, %v1106, 0.0
        %1115 = vadd.xlane.f32.xlu0 %v1114
        %v1116 = vpop.xlane.xlu0 %1115
        %v1117 = vsel %vm995, %v1108, 0.0
        %1118 = vadd.xlane.f32.xlu0 %v1117
        %v1119 = vpop.xlane.xlu0 %1118
        %v1120 = vsel %vm995, %v1110, 0.0
        %1121 = vadd.xlane.f32.xlu0 %v1120
        %v1122 = vpop.xlane.xlu0 %1121
        %v1123 = vrcp.pop %v1113
        %v1124 = vrcp.pop %v1116
        %v1125 = vrcp.pop %v1119
        %v1126 = vrcp.pop %v1122
        %v1127 = vmul.f32 %v1104, %v1123
        %v1128 = vmul.f32 %v1106, %v1124
        %v1129 = vmul.f32 %v1108, %v1125
        %v1130 = vmul.f32 %v1110, %v1126
        %v1131 = vpack.c.bf16 %v1127, %v1127
        %v1132 = vpack.c.bf16 %v1128, %v1128
        %v1133 = vpack.c.bf16 %v1129, %v1129
        %v1134 = vpack.c.bf16 %v1130, %v1130
        %1135 = vrot.lane.b32.xlu0 %v992, 64
        %v1136 = vpop.permute.xlu0 %1135
        %v1138 = vsel %vm995, %v1131, 0
        %vm1140 = vcmask 1043456
        %v1142 = vsel %vm1140, %v1136, 0
        %1144 = vmatpush.bf16.msra.mxu0 0
        %1145 = vmatpush.bf16.msra.mxu0 0
        %1146 = vmatpush.bf16.msra.mxu0 0
        %1147 = vmatpush.bf16.msra.mxu0 0
        %1148 = vmatpush.bf16.msra.mxu0 0
        %1149 = vmatpush.bf16.msra.mxu0 0
        %1150 = vmatpush.bf16.msra.mxu0 0
        %1151 = vmatpush.bf16.msra.mxu0 %v1142
        %1152 = vmatmul.bf16.gmra.mxu0 %v1138
        %v1153 = vpop.f32.mrf.mxu0
        %v1154 = vadd.f32 0.0, %v1153
        %v1155 = vpop.f32.mrf.mxu0
        %1156 = vdwg.mxu0
        %1157 = vrot.lane.b32.xlu0 %v1017, 64
        %v1158 = vpop.permute.xlu0 %1157
        %v1160 = vsel %vm995, %v1132, 0
        %v1163 = vsel %vm1140, %v1158, 0
        %1165 = vmatpush.bf16.msra.mxu0 0
        %1166 = vmatpush.bf16.msra.mxu0 0
        %1167 = vmatpush.bf16.msra.mxu0 0
        %1168 = vmatpush.bf16.msra.mxu0 0
        %1169 = vmatpush.bf16.msra.mxu0 0
        %1170 = vmatpush.bf16.msra.mxu0 0
        %1171 = vmatpush.bf16.msra.mxu0 0
        %1172 = vmatpush.bf16.msra.mxu0 %v1163
        %1173 = vmatmul.bf16.gmra.mxu0 %v1160
        %v1174 = vpop.f32.mrf.mxu0
        %v1175 = vadd.f32 0.0, %v1174
        %v1176 = vpop.f32.mrf.mxu0
        %1177 = vdwg.mxu0
        %1178 = vrot.lane.b32.xlu0 %v1041, 64
        %v1179 = vpop.permute.xlu0 %1178
        %v1181 = vsel %vm995, %v1133, 0
        %v1184 = vsel %vm1140, %v1179, 0
        %1186 = vmatpush.bf16.msra.mxu0 0
        %1187 = vmatpush.bf16.msra.mxu0 0
        %1188 = vmatpush.bf16.msra.mxu0 0
        %1189 = vmatpush.bf16.msra.mxu0 0
        %1190 = vmatpush.bf16.msra.mxu0 0
        %1191 = vmatpush.bf16.msra.mxu0 0
        %1192 = vmatpush.bf16.msra.mxu0 0
        %1193 = vmatpush.bf16.msra.mxu0 %v1184
        %1194 = vmatmul.bf16.gmra.mxu0 %v1181
        %v1195 = vpop.f32.mrf.mxu0
        %v1196 = vadd.f32 0.0, %v1195
        %v1197 = vpop.f32.mrf.mxu0
        %1198 = vdwg.mxu0
        %1199 = vrot.lane.b32.xlu0 %v1065, 64
        %v1200 = vpop.permute.xlu0 %1199
        %v1202 = vsel %vm995, %v1134, 0
        %v1205 = vsel %vm1140, %v1200, 0
        %1207 = vmatpush.bf16.msra.mxu0 0
        %1208 = vmatpush.bf16.msra.mxu0 0
        %1209 = vmatpush.bf16.msra.mxu0 0
        %1210 = vmatpush.bf16.msra.mxu0 0
        %1211 = vmatpush.bf16.msra.mxu0 0
        %1212 = vmatpush.bf16.msra.mxu0 0
        %1213 = vmatpush.bf16.msra.mxu0 0
        %1214 = vmatpush.bf16.msra.mxu0 %v1205
        %1215 = vmatmul.bf16.gmra.mxu0 %v1202
        %v1216 = vpop.f32.mrf.mxu0
        %v1217 = vadd.f32 0.0, %v1216
        %v1218 = vpop.f32.mrf.mxu0
        %1219 = vdwg.mxu0
        %v1220 = vpack.c.bf16 %v1154, %v1154
        %v1221 = vpack.c.bf16 %v1175, %v1175
        %v1222 = vpack.c.bf16 %v1196, %v1196
        %v1223 = vpack.c.bf16 %v1217, %v1217
        %v1224 = vld [vmem:[%s742] sm:$0xf]
        %v1225 = vld [vmem:[%s742 + $0x4] sm:$0xf]
        %v1226 = vld [vmem:[%s742 + $0x8] sm:$0xf]
        %v1227 = vld [vmem:[%s742 + $0xc] sm:$0xf]
        %v1229 = vsel %vm995, %v1220, 0
        %v1232 = vsel %vm1140, %v1224, 0
        %1234 = vmatpush.bf16.msra.mxu0 0
        %1235 = vmatpush.bf16.msra.mxu0 0
        %1236 = vmatpush.bf16.msra.mxu0 0
        %1237 = vmatpush.bf16.msra.mxu0 0
        %1238 = vmatpush.bf16.msra.mxu0 0
        %1239 = vmatpush.bf16.msra.mxu0 0
        %1240 = vmatpush.bf16.msra.mxu0 0
        %1241 = vmatpush.bf16.msra.mxu0 %v1232
        %1242 = vmatmul.bf16.gmra.mxu0 %v1229
        %v1243 = vpop.f32.mrf.mxu0
        %v1244 = vadd.f32 0.0, %v1243
        %v1245 = vpop.f32.mrf.mxu0
        %1246 = vdwg.mxu0
        %v1248 = vsel %vm995, %v1221, 0
        %v1251 = vsel %vm1140, %v1225, 0
        %1253 = vmatpush.bf16.msra.mxu0 0
        %1254 = vmatpush.bf16.msra.mxu0 0
        %1255 = vmatpush.bf16.msra.mxu0 0
        %1256 = vmatpush.bf16.msra.mxu0 0
        %1257 = vmatpush.bf16.msra.mxu0 0
        %1258 = vmatpush.bf16.msra.mxu0 0
        %1259 = vmatpush.bf16.msra.mxu0 0
        %1260 = vmatpush.bf16.msra.mxu0 %v1251
        %1261 = vmatmul.bf16.gmra.mxu0 %v1248
        %v1262 = vpop.f32.mrf.mxu0
        %v1263 = vadd.f32 0.0, %v1262
        %v1264 = vpop.f32.mrf.mxu0
        %1265 = vdwg.mxu0
        %v1267 = vsel %vm995, %v1222, 0
        %v1270 = vsel %vm1140, %v1226, 0
        %1272 = vmatpush.bf16.msra.mxu0 0
        %1273 = vmatpush.bf16.msra.mxu0 0
        %1274 = vmatpush.bf16.msra.mxu0 0
        %1275 = vmatpush.bf16.msra.mxu0 0
        %1276 = vmatpush.bf16.msra.mxu0 0
        %1277 = vmatpush.bf16.msra.mxu0 0
        %1278 = vmatpush.bf16.msra.mxu0 0
        %1279 = vmatpush.bf16.msra.mxu0 %v1270
        %1280 = vmatmul.bf16.gmra.mxu0 %v1267
        %v1281 = vpop.f32.mrf.mxu0
        %v1282 = vadd.f32 0.0, %v1281
        %v1283 = vpop.f32.mrf.mxu0
        %1284 = vdwg.mxu0
        %v1286 = vsel %vm995, %v1223, 0
        %v1289 = vsel %vm1140, %v1227, 0
        %1291 = vmatpush.bf16.msra.mxu0 0
        %1292 = vmatpush.bf16.msra.mxu0 0
        %1293 = vmatpush.bf16.msra.mxu0 0
        %1294 = vmatpush.bf16.msra.mxu0 0
        %1295 = vmatpush.bf16.msra.mxu0 0
        %1296 = vmatpush.bf16.msra.mxu0 0
        %1297 = vmatpush.bf16.msra.mxu0 0
        %1298 = vmatpush.bf16.msra.mxu0 %v1289
        %1299 = vmatmul.bf16.gmra.mxu0 %v1286
        %v1300 = vpop.f32.mrf.mxu0
        %v1301 = vadd.f32 0.0, %v1300
        %v1302 = vpop.f32.mrf.mxu0
        %1303 = vdwg.mxu0
        %v1304 = vsel %vm951, %v1244, 0.0
        %v1305 = vsel %vm951, %v1263, 0.0
        %v1306 = vadd.f32 %v1304, %v1305
        %v1307 = vsel %vm951, %v1282, 0.0
        %v1308 = vadd.f32 %v1306, %v1307
        %v1309 = vsel %vm951, %v1301, 0.0
        %v1310 = vadd.f32 %v1308, %v1309
        %v1311 = vld [vmem:[%s878] sm:$0x1]
        %v1313 = vperm.slane %v1311, 0
        %v1315 = vadd.f32 %v1310, %v1313
        %v1316 = vadd.f32 %v929, %v1315
        %v1317 = vld [vmem:[%s887] sm:$0x1]
        %v1318 = vld [vmem:[%s771] sm:$0x1]
        %v1319 = vsel %vm951, %v1316, 0.0
        %1320 = vadd.xlane.f32.xlu0 %v1319
        %v1321 = vpop.xlane.xlu0 %1320
        %v1322 = vrcp.pop 32.0
        %v1323 = vmul.f32 32.0, %v1322
        %v1324 = vsub.f32 1.0, %v1323
        %v1325 = vmul.f32 %v1322, %v1324
        %v1326 = vadd.f32 %v1322, %v1325
        %vm1327 = vweird.f32 %v1322
        %v1328 = vsel %vm1327, %v1322, %v1326
        %v1329 = vmul.f32 %v1321, %v1328
        %v1330 = vsub.f32 %v1316, %v1329
        %v1331 = vmul.f32 %v1330, %v1330
        %v1332 = vsel %vm951, %v1331, 0.0
        %1333 = vadd.xlane.f32.xlu0 %v1332
        %v1334 = vpop.xlane.xlu0 %1333
        %v1335 = vmul.f32 %v1334, %v1328
        %v1336 = vadd.f32 %v1335, 1e-05
        %v1337 = vrsqrt.pop %v1336
        %v1338 = vmul.f32 %v1337, %v1336
        %v1339 = vmul.f32 %v1338, %v1337
        %v1340 = vmul.f32 0.5, %v1339
        %v1341 = vsub.f32 1.5, %v1340
        %v1342 = vmul.f32 %v1337, %v1341
        %vm1343 = vweird.f32 %v1336
        %vm1344 = vweird.f32 %v1337
        %vm1345 = vmor %vm1343, %vm1344
        %v1346 = vsel %vm1345, %v1337, %v1342
        %v1347 = vmul.f32 %v1330, %v1346
        %v1349 = vperm.slane %v1317, 0
        %v1351 = vmul.f32 %v1347, %v1349
        %v1353 = vperm.slane %v1318, 0
        %v1355 = vadd.f32 %v1351, %v1353
        %v1356 = vpack.c.bf16 %v1355, %v1355
        %v1357 = vld [vmem:[%s752] sm:$0xf]
        %v1358 = vld [vmem:[%s752 + $0x4] sm:$0xf]
        %v1359 = vld [vmem:[%s752 + $0x8] sm:$0xf]
        %v1360 = vld [vmem:[%s752 + $0xc] sm:$0xf]
        %v1361 = vld [vmem:[%s881] sm:$0x1]
        %v1363 = vperm.slane %v1361, 0
        %v1369 = vunpack.c.l.b16 %v1357
        %v1370 = vunpack.c.l.b16 %v1358
        %v1371 = vunpack.c.l.b16 %v1359
        %v1372 = vunpack.c.l.b16 %v1360
        %v1373 = vpack.c.b16 %v1370, %v1369
        %v1374 = vpack.c.b16 %v1372, %v1371
        %v1378 = vsel %vm951, %v1356, 0
        %1380 = vmatpush.bf16.msra.mxu0 0
        %1381 = vmatpush.bf16.msra.mxu0 0
        %1382 = vmatpush.bf16.msra.mxu0 0
        %1383 = vmatpush.bf16.msra.mxu0 0
        %1384 = vmatpush.bf16.msra.mxu0 0
        %1385 = vmatpush.bf16.msra.mxu0 0
        %1386 = vmatpush.bf16.msra.mxu0 %v1374
        %1387 = vmatpush.bf16.msra.mxu0 %v1373
        %1388 = vmatmul.bf16.gmra.mxu0 %v1378
        %v1389 = vpop.f32.mrf.mxu0
        %v1390 = vadd.f32 %v1363, %v1389
        %v1391 = vpop.f32.mrf.mxu0
        %1392 = vdwg.mxu0
        %v1393 = vmax.f32 %v1390, 0.0
        %v1394 = vpack.c.bf16 %v1393, %v1393
        %v1395 = vld [vmem:[%s762] sm:$0xf]
        %v1396 = vld [vmem:[%s762 + $0x4] sm:$0xf]
        %v1397 = vld [vmem:[%s762 + $0x8] sm:$0xf]
        %v1398 = vld [vmem:[%s762 + $0xc] sm:$0xf]
        %v1399 = vld [vmem:[%s884] sm:$0x1]
        %v1401 = vperm.slane %v1399, 0
        %v1407 = vunpack.c.l.b16 %v1395
        %v1408 = vunpack.c.l.b16 %v1396
        %v1409 = vunpack.c.l.b16 %v1397
        %v1410 = vunpack.c.l.b16 %v1398
        %v1411 = vpack.c.b16 %v1408, %v1407
        %v1412 = vpack.c.b16 %v1410, %v1409
        %v1416 = vsel %vm951, %v1394, 0
        %1418 = vmatpush.bf16.msra.mxu0 0
        %1419 = vmatpush.bf16.msra.mxu0 0
        %1420 = vmatpush.bf16.msra.mxu0 0
        %1421 = vmatpush.bf16.msra.mxu0 0
        %1422 = vmatpush.bf16.msra.mxu0 0
        %1423 = vmatpush.bf16.msra.mxu0 0
        %1424 = vmatpush.bf16.msra.mxu0 %v1412
        %1425 = vmatpush.bf16.msra.mxu0 %v1411
        %1426 = vmatmul.bf16.gmra.mxu0 %v1416
        %v1427 = vpop.f32.mrf.mxu0
        %v1428 = vadd.f32 %v1401, %v1427
        %v1429 = vpop.f32.mrf.mxu0
        %1430 = vdwg.mxu0
        %v1431 = vadd.f32 %v1355, %v1428
        %v1432 = vld [vmem:[%s890] sm:$0x1]
        %v1433 = vld [vmem:[%s780] sm:$0x1]
        %v1434 = vsel %vm951, %v1431, 0.0
        %1435 = vadd.xlane.f32.xlu0 %v1434
        %v1436 = vpop.xlane.xlu0 %1435
        %v1437 = vmul.f32 %v1436, %v1328
        %v1438 = vsub.f32 %v1431, %v1437
        %v1439 = vmul.f32 %v1438, %v1438
        %v1440 = vsel %vm951, %v1439, 0.0
        %1441 = vadd.xlane.f32.xlu0 %v1440
        %v1442 = vpop.xlane.xlu0 %1441
        %v1443 = vmul.f32 %v1442, %v1328
        %v1444 = vadd.f32 %v1443, 1e-05
        %v1445 = vrsqrt.pop %v1444
        %v1446 = vmul.f32 %v1445, %v1444
        %v1447 = vmul.f32 %v1446, %v1445
        %v1448 = vmul.f32 0.5, %v1447
        %v1449 = vsub.f32 1.5, %v1448
        %v1450 = vmul.f32 %v1445, %v1449
        %vm1451 = vweird.f32 %v1444
        %vm1452 = vweird.f32 %v1445
        %vm1453 = vmor %vm1451, %vm1452
        %v1454 = vsel %vm1453, %v1445, %v1450
        %v1455 = vmul.f32 %v1438, %v1454
        %v1457 = vperm.slane %v1432, 0
        %v1459 = vmul.f32 %v1455, %v1457
        %v1461 = vperm.slane %v1433, 0
        %v1463 = vadd.f32 %v1459, %v1461
        %1464 = vst.msk [vmem:[#allocation2] sm:$0xff] %vm951, %v1463
        %p1465 = scmp.eq.s32.totalorder %s41, 1
        // Predicated region
        $region133: #{tpu_custom_call.1} parent=87 // pred_check
          %p1466 = pneg %p1465
        $region134: #{tpu_custom_call.1} parent=87 // pred_check_branch
          %1468 = sbr.rel (%p1466) target = $region136
        $region135: #{tpu_custom_call.1} parent=87 // pred_region
          %v1469 = vpack.c.bf16 %v1463, %v1463
          %v1470 = vld [vmem:[#allocation18] sm:$0xf]
          %v1471 = vld [vmem:[#allocation18 + $0x4] sm:$0xf]
          %v1472 = vld [vmem:[#allocation18 + $0x8] sm:$0xf]
          %v1473 = vld [vmem:[#allocation18 + $0xc] sm:$0xf]
          %v1474 = vld [vmem:[%s16] sm:$0x1]
          %v1476 = vperm.slane %v1474, 0
          %v1482 = vunpack.c.l.b16 %v1470
          %v1483 = vunpack.c.l.b16 %v1471
          %v1484 = vunpack.c.l.b16 %v1472
          %v1485 = vunpack.c.l.b16 %v1473
          %v1486 = vpack.c.b16 %v1483, %v1482
          %v1487 = vpack.c.b16 %v1485, %v1484
          %v1491 = vsel %vm951, %v1469, 0
          %1493 = vmatpush.bf16.msra.mxu0 0
          %1494 = vmatpush.bf16.msra.mxu0 0
          %1495 = vmatpush.bf16.msra.mxu0 0
          %1496 = vmatpush.bf16.msra.mxu0 0
          %1497 = vmatpush.bf16.msra.mxu0 0
          %1498 = vmatpush.bf16.msra.mxu0 0
          %1499 = vmatpush.bf16.msra.mxu0 %v1487
          %1500 = vmatpush.bf16.msra.mxu0 %v1486
          %1501 = vmatmul.bf16.gmra.mxu0 %v1491
          %v1502 = vpop.f32.mrf.mxu0
          %v1503 = vadd.f32 %v1476, %v1502
          %v1504 = vpop.f32.mrf.mxu0
          %1505 = vdwg.mxu0
          %1506 = vst [vmem:[#allocation20] sm:$0xff] %v1503
        $region136: #{tpu_custom_call.1} parent=87 // pred_fallthru
          _
        // Predicated region
        $region137: #{tpu_custom_call.1} parent=87 // pred_check
          %p1507 = pneg %p471
        $region138: #{tpu_custom_call.1} parent=87 // pred_check_branch
          %1509 = sbr.rel (%p1507) target = $region140
        $region139: #{tpu_custom_call.1} parent=87 // pred_region
          %1511 = vsyncadd [#allocation5], 0
          %s1513 = sshll.u32 [#allocation20], 4
          %s1514 = int_to_ptr.vmem [resolvable:$true] %s1513
          %s1515 = sshll.u32 %s17, 4
          %s1516 = int_to_ptr.hbm [resolvable:$true] %s1515
          %1518 = dma.vmem_to_hbm [thread:$0]  %s1514, 128, %s1516, [#allocation5]
        $region140: #{tpu_custom_call.1} parent=87 // pred_fallthru
          _
        // Predicated region
        $region141: #{tpu_custom_call.1} parent=87 // pred_check
          %p1519 = pneg %p471
        $region142: #{tpu_custom_call.1} parent=87 // pred_check_branch
          %1521 = sbr.rel (%p1519) target = $region144
        $region143: #{tpu_custom_call.1} parent=87 // pred_region
          %1523 = dma.done [#allocation5], 128
        $region144: #{tpu_custom_call.1} parent=87 // pred_fallthru
          _
      $region88: #{tpu_custom_call.1} parent=5 // pred_fallthru
        _
      %p1524 = scmp.le.s32.totalorder 2, %s36
      // Predicated region
      $region145: #{tpu_custom_call.1} parent=5 // pred_check
        %p1525 = pneg %p1524
      $region146: #{tpu_custom_call.1} parent=5 // pred_check_branch
        %1527 = sbr.rel (%p1525) target = $region148
      $region147: #{tpu_custom_call.1} parent=5 // pred_region
        %s1528 = ssub.s32 %s36, 2
      $region148: #{tpu_custom_call.1} parent=5 // pred_fallthru
        _
    $region6: #{tpu_custom_call.1} parent=1 // loop_footer
      %s40 = sadd.s32 1, %s36
    $region7: #{tpu_custom_call.1} parent=1 // loop_footer_branch
      %35 = sbr.rel target = $region3
    $region8: #{tpu_custom_call.1} parent=1 // loop_exit
      _
    %1529 = vsyncpa [#allocation4], 1
    %s1530 = scalar_lea.sflag [#allocation4], 1
    %1531 = vsyncpa %s1530, 1
    %1532 = vsyncpa [#allocation7], 1
    %1533 = vsyncpa [#allocation10], 1
    %s1534 = scalar_lea.sflag [#allocation10], 1
    %1535 = vsyncpa %s1534, 1
    %1536 = vsyncpa [#allocation13], 1
    %s1537 = scalar_lea.sflag [#allocation13], 1
    %1538 = vsyncpa %s1537, 1
    %1539 = vsyncpa [#allocation16], 1
    %s1540 = scalar_lea.sflag [#allocation16], 1
    %1541 = vsyncpa %s1540, 1
    %1542 = vsyncpa [#allocation19], 1
    %1543 = vsyncpa [#allocation5], 1
    %s1544 = scalar_lea.sflag [#allocation5], 1
    %1545 = vsyncpa %s1544, 1

</llo_original>
